<compile_context>
chip_gen: v7x
topology: tpu7x:2x2x1
jax: 0.10.0
libtpu: 0.0.40
codegen_flags: <defaults>
</compile_context>

<pallas_src>
import jax
import jax.numpy as jnp
from jax.experimental import pallas as pl
from jax.experimental.pallas import tpu as pltpu

N = 2                             # batch
H, W = 7, 12                      # input spatial -> (H-2)*(W-7) = 25 per channel
OC, KH, KW = 4, 3, 8              # conv1: out_channels=4, kernel=(3, 8)
OH, OW = H - KH + 1, W - KW + 1   # 5, 5
P = OH * OW                       # 25 features per channel (lane dim)
T = KH * KW                       # 24 taps per channel


def _tree_sum(terms):
    """Balanced-tree sum of a Python list of arrays (short dependence chain)."""
    terms = list(terms)
    while len(terms) > 1:
        nxt = [terms[i] + terms[i + 1] for i in range(0, len(terms) - 1, 2)]
        if len(terms) % 2:
            nxt.append(terms[-1])
        terms = nxt
    return terms[0]


def net_kernel(wc_ref, b_ref, patches_ref, wf_ref, o_ref):
    """wc_ref:      SMEM (OC*T,) f32   conv taps (flattened OIHW order)
       b_ref:       SMEM (1,)    f32   fc1 bias
       patches_ref: VMEM (T, N, P)     im2col tap slabs, lane-dense last dim
       wf_ref:      VMEM (OC, 1, P)    fc1 weight rows in C,H,W flatten order
       o_ref:       VMEM (N, 1)        output."""
    weighted = []
    for oc in range(OC):
        # conv channel oc: SMEM scalar tap * vector patch (pure VPU), tree sum
        prods = [wc_ref[oc * T + t] * patches_ref[t] for t in range(T)]
        act = jnp.maximum(_tree_sum(prods), 0.0)          # (N, P)  relu
        weighted.append(act * wf_ref[oc])                 # (N, P) * (1, P)
    total = _tree_sum(weighted)                           # (N, P)
    # fc1: single last-axis lane reduce + scalar bias from SMEM
    o_ref[...] = jnp.sum(total, axis=-1, keepdims=True) + b_ref[0]


@jax.jit
def net_forward(x_nchw, conv_w, fc_w, fc_b):
    """x_nchw: (N,1,H,W), conv_w: (OC,1,KH,KW), fc_w: (1,OC*P), fc_b: (1,)."""
    n = x_nchw.shape[0]
    x2 = x_nchw.reshape(n, H, W).astype(jnp.float32)      # squeeze channel
    # im2col in the wrapper: tap-major slabs (T, N, P); tap t = kh*KW + kw.
    patches = jnp.stack(
        [x2[:, kh:kh + OH, kw:kw + OW].reshape(n, P)
         for kh in range(KH) for kw in range(KW)], axis=0)        # (T, N, P)
    wc_flat = conv_w.astype(jnp.float32).reshape(OC * T)          # (96,) -> SMEM
    wf = fc_w.astype(jnp.float32).reshape(OC, 1, P)               # C,H,W flatten order
    b = fc_b.astype(jnp.float32).reshape(1)                       # (1,)  -> SMEM

    return pl.pallas_call(
        net_kernel,
        out_shape=jax.ShapeDtypeStruct((n, 1), jnp.float32),
        in_specs=[
            pl.BlockSpec(memory_space=pltpu.MemorySpace.SMEM),    # conv taps
            pl.BlockSpec(memory_space=pltpu.MemorySpace.SMEM),    # fc bias
            pl.BlockSpec(memory_space=pltpu.MemorySpace.VMEM),    # im2col patches
            pl.BlockSpec(memory_space=pltpu.MemorySpace.VMEM),    # fc weight slabs
        ],
        out_specs=pl.BlockSpec(memory_space=pltpu.MemorySpace.VMEM),
    )(wc_flat, b, patches, wf)


def ref_forward(x_nchw, conv_w, fc_w, fc_b):
    """Pure-JAX reference matching the PyTorch forward."""
    out = jax.lax.conv_general_dilated(
        x_nchw, conv_w, window_strides=(1, 1), padding="VALID",
        dimension_numbers=("NCHW", "OIHW", "NCHW"))
    out = jnp.maximum(out, 0.0)
    out = out.reshape(out.shape[0], -1)                   # (N, 100) C,H,W order
    return out @ fc_w.T + fc_b


if __name__ == "__main__":
    key = jax.random.PRNGKey(0)
    kx, kc, kf, kb = jax.random.split(key, 4)

    # deterministic example input (NCHW, like PyTorch)
    x = jax.random.normal(kx, (N, 1, H, W), jnp.float32)

    # deterministic PyTorch-style uniform(-1/sqrt(fan_in), 1/sqrt(fan_in)) init
    fan_conv = 1 * KH * KW
    conv_w = jax.random.uniform(kc, (OC, 1, KH, KW), jnp.float32,
                                -1.0 / fan_conv ** 0.5, 1.0 / fan_conv ** 0.5)
    fan_fc = OC * P
    fc_w = jax.random.uniform(kf, (1, fan_fc), jnp.float32,
                              -1.0 / fan_fc ** 0.5, 1.0 / fan_fc ** 0.5)
    fc_b = jax.random.uniform(kb, (1,), jnp.float32,
                              -1.0 / fan_fc ** 0.5, 1.0 / fan_fc ** 0.5)

    out = jax.block_until_ready(net_forward(x, conv_w, fc_w, fc_b))
    ref = ref_forward(x, conv_w, fc_w, fc_b)

    assert out.shape == (N, 1), out.shape
    assert jnp.allclose(out, ref, atol=1e-5), (out, ref)
    print("KERNEL_OK")
</pallas_src>

<mosaic_0001>
module attributes {stable_mosaic.version = 11 : i64} {
  func.func @net_kernel(%arg0: memref<96xf32, #tpu.memory_space<smem>>, %arg1: memref<1xf32, #tpu.memory_space<smem>>, %arg2: memref<24x2x25xf32, #tpu.memory_space<vmem>>, %arg3: memref<4x1x25xf32, #tpu.memory_space<vmem>>, %arg4: memref<2x1xf32, #tpu.memory_space<vmem>>) attributes {dimension_semantics = [], scalar_prefetch = 0 : i64, scratch_operands = 0 : i64, tpu.core_type = #tpu.core_type<tc>} {
    %c0 = arith.constant 0 : index
    %0 = memref.load %arg0[%c0] : memref<96xf32, #tpu.memory_space<smem>>
    %c0_0 = arith.constant 0 : index
    %c0_1 = arith.constant 0 : index
    %c0_2 = arith.constant 0 : index
    %1 = vector.load %arg2[%c0_0, %c0_1, %c0_2] : memref<24x2x25xf32, #tpu.memory_space<vmem>>, vector<1x2x25xf32>
    %2 = vector.shape_cast %1 : vector<1x2x25xf32> to vector<2x25xf32>
    %3 = vector.broadcast %0 : f32 to vector<2x25xf32>
    %4 = arith.mulf %3, %2 : vector<2x25xf32>
    %c1 = arith.constant 1 : index
    %5 = memref.load %arg0[%c1] : memref<96xf32, #tpu.memory_space<smem>>
    %c1_3 = arith.constant 1 : index
    %c0_4 = arith.constant 0 : index
    %c0_5 = arith.constant 0 : index
    %6 = vector.load %arg2[%c1_3, %c0_4, %c0_5] : memref<24x2x25xf32, #tpu.memory_space<vmem>>, vector<1x2x25xf32>
    %7 = vector.shape_cast %6 : vector<1x2x25xf32> to vector<2x25xf32>
    %8 = vector.broadcast %5 : f32 to vector<2x25xf32>
    %9 = arith.mulf %8, %7 : vector<2x25xf32>
    %c2 = arith.constant 2 : index
    %10 = memref.load %arg0[%c2] : memref<96xf32, #tpu.memory_space<smem>>
    %c2_6 = arith.constant 2 : index
    %c0_7 = arith.constant 0 : index
    %c0_8 = arith.constant 0 : index
    %11 = vector.load %arg2[%c2_6, %c0_7, %c0_8] : memref<24x2x25xf32, #tpu.memory_space<vmem>>, vector<1x2x25xf32>
    %12 = vector.shape_cast %11 : vector<1x2x25xf32> to vector<2x25xf32>
    %13 = vector.broadcast %10 : f32 to vector<2x25xf32>
    %14 = arith.mulf %13, %12 : vector<2x25xf32>
    %c3 = arith.constant 3 : index
    %15 = memref.load %arg0[%c3] : memref<96xf32, #tpu.memory_space<smem>>
    %c3_9 = arith.constant 3 : index
    %c0_10 = arith.constant 0 : index
    %c0_11 = arith.constant 0 : index
    %16 = vector.load %arg2[%c3_9, %c0_10, %c0_11] : memref<24x2x25xf32, #tpu.memory_space<vmem>>, vector<1x2x25xf32>
    %17 = vector.shape_cast %16 : vector<1x2x25xf32> to vector<2x25xf32>
    %18 = vector.broadcast %15 : f32 to vector<2x25xf32>
    %19 = arith.mulf %18, %17 : vector<2x25xf32>
    %c4 = arith.constant 4 : index
    %20 = memref.load %arg0[%c4] : memref<96xf32, #tpu.memory_space<smem>>
    %c4_12 = arith.constant 4 : index
    %c0_13 = arith.constant 0 : index
    %c0_14 = arith.constant 0 : index
    %21 = vector.load %arg2[%c4_12, %c0_13, %c0_14] : memref<24x2x25xf32, #tpu.memory_space<vmem>>, vector<1x2x25xf32>
    %22 = vector.shape_cast %21 : vector<1x2x25xf32> to vector<2x25xf32>
    %23 = vector.broadcast %20 : f32 to vector<2x25xf32>
    %24 = arith.mulf %23, %22 : vector<2x25xf32>
    %c5 = arith.constant 5 : index
    %25 = memref.load %arg0[%c5] : memref<96xf32, #tpu.memory_space<smem>>
    %c5_15 = arith.constant 5 : index
    %c0_16 = arith.constant 0 : index
    %c0_17 = arith.constant 0 : index
    %26 = vector.load %arg2[%c5_15, %c0_16, %c0_17] : memref<24x2x25xf32, #tpu.memory_space<vmem>>, vector<1x2x25xf32>
    %27 = vector.shape_cast %26 : vector<1x2x25xf32> to vector<2x25xf32>
    %28 = vector.broadcast %25 : f32 to vector<2x25xf32>
    %29 = arith.mulf %28, %27 : vector<2x25xf32>
    %c6 = arith.constant 6 : index
    %30 = memref.load %arg0[%c6] : memref<96xf32, #tpu.memory_space<smem>>
    %c6_18 = arith.constant 6 : index
    %c0_19 = arith.constant 0 : index
    %c0_20 = arith.constant 0 : index
    %31 = vector.load %arg2[%c6_18, %c0_19, %c0_20] : memref<24x2x25xf32, #tpu.memory_space<vmem>>, vector<1x2x25xf32>
    %32 = vector.shape_cast %31 : vector<1x2x25xf32> to vector<2x25xf32>
    %33 = vector.broadcast %30 : f32 to vector<2x25xf32>
    %34 = arith.mulf %33, %32 : vector<2x25xf32>
    %c7 = arith.constant 7 : index
    %35 = memref.load %arg0[%c7] : memref<96xf32, #tpu.memory_space<smem>>
    %c7_21 = arith.constant 7 : index
    %c0_22 = arith.constant 0 : index
    %c0_23 = arith.constant 0 : index
    %36 = vector.load %arg2[%c7_21, %c0_22, %c0_23] : memref<24x2x25xf32, #tpu.memory_space<vmem>>, vector<1x2x25xf32>
    %37 = vector.shape_cast %36 : vector<1x2x25xf32> to vector<2x25xf32>
    %38 = vector.broadcast %35 : f32 to vector<2x25xf32>
    %39 = arith.mulf %38, %37 : vector<2x25xf32>
    %c8 = arith.constant 8 : index
    %40 = memref.load %arg0[%c8] : memref<96xf32, #tpu.memory_space<smem>>
    %c8_24 = arith.constant 8 : index
    %c0_25 = arith.constant 0 : index
    %c0_26 = arith.constant 0 : index
    %41 = vector.load %arg2[%c8_24, %c0_25, %c0_26] : memref<24x2x25xf32, #tpu.memory_space<vmem>>, vector<1x2x25xf32>
    %42 = vector.shape_cast %41 : vector<1x2x25xf32> to vector<2x25xf32>
    %43 = vector.broadcast %40 : f32 to vector<2x25xf32>
    %44 = arith.mulf %43, %42 : vector<2x25xf32>
    %c9 = arith.constant 9 : index
    %45 = memref.load %arg0[%c9] : memref<96xf32, #tpu.memory_space<smem>>
    %c9_27 = arith.constant 9 : index
    %c0_28 = arith.constant 0 : index
    %c0_29 = arith.constant 0 : index
    %46 = vector.load %arg2[%c9_27, %c0_28, %c0_29] : memref<24x2x25xf32, #tpu.memory_space<vmem>>, vector<1x2x25xf32>
    %47 = vector.shape_cast %46 : vector<1x2x25xf32> to vector<2x25xf32>
    %48 = vector.broadcast %45 : f32 to vector<2x25xf32>
    %49 = arith.mulf %48, %47 : vector<2x25xf32>
    %c10 = arith.constant 10 : index
    %50 = memref.load %arg0[%c10] : memref<96xf32, #tpu.memory_space<smem>>
    %c10_30 = arith.constant 10 : index
    %c0_31 = arith.constant 0 : index
    %c0_32 = arith.constant 0 : index
    %51 = vector.load %arg2[%c10_30, %c0_31, %c0_32] : memref<24x2x25xf32, #tpu.memory_space<vmem>>, vector<1x2x25xf32>
    %52 = vector.shape_cast %51 : vector<1x2x25xf32> to vector<2x25xf32>
    %53 = vector.broadcast %50 : f32 to vector<2x25xf32>
    %54 = arith.mulf %53, %52 : vector<2x25xf32>
    %c11 = arith.constant 11 : index
    %55 = memref.load %arg0[%c11] : memref<96xf32, #tpu.memory_space<smem>>
    %c11_33 = arith.constant 11 : index
    %c0_34 = arith.constant 0 : index
    %c0_35 = arith.constant 0 : index
    %56 = vector.load %arg2[%c11_33, %c0_34, %c0_35] : memref<24x2x25xf32, #tpu.memory_space<vmem>>, vector<1x2x25xf32>
    %57 = vector.shape_cast %56 : vector<1x2x25xf32> to vector<2x25xf32>
    %58 = vector.broadcast %55 : f32 to vector<2x25xf32>
    %59 = arith.mulf %58, %57 : vector<2x25xf32>
    %c12 = arith.constant 12 : index
    %60 = memref.load %arg0[%c12] : memref<96xf32, #tpu.memory_space<smem>>
    %c12_36 = arith.constant 12 : index
    %c0_37 = arith.constant 0 : index
    %c0_38 = arith.constant 0 : index
    %61 = vector.load %arg2[%c12_36, %c0_37, %c0_38] : memref<24x2x25xf32, #tpu.memory_space<vmem>>, vector<1x2x25xf32>
    %62 = vector.shape_cast %61 : vector<1x2x25xf32> to vector<2x25xf32>
    %63 = vector.broadcast %60 : f32 to vector<2x25xf32>
    %64 = arith.mulf %63, %62 : vector<2x25xf32>
    %c13 = arith.constant 13 : index
    %65 = memref.load %arg0[%c13] : memref<96xf32, #tpu.memory_space<smem>>
    %c13_39 = arith.constant 13 : index
    %c0_40 = arith.constant 0 : index
    %c0_41 = arith.constant 0 : index
    %66 = vector.load %arg2[%c13_39, %c0_40, %c0_41] : memref<24x2x25xf32, #tpu.memory_space<vmem>>, vector<1x2x25xf32>
    %67 = vector.shape_cast %66 : vector<1x2x25xf32> to vector<2x25xf32>
    %68 = vector.broadcast %65 : f32 to vector<2x25xf32>
    %69 = arith.mulf %68, %67 : vector<2x25xf32>
    %c14 = arith.constant 14 : index
    %70 = memref.load %arg0[%c14] : memref<96xf32, #tpu.memory_space<smem>>
    %c14_42 = arith.constant 14 : index
    %c0_43 = arith.constant 0 : index
    %c0_44 = arith.constant 0 : index
    %71 = vector.load %arg2[%c14_42, %c0_43, %c0_44] : memref<24x2x25xf32, #tpu.memory_space<vmem>>, vector<1x2x25xf32>
    %72 = vector.shape_cast %71 : vector<1x2x25xf32> to vector<2x25xf32>
    %73 = vector.broadcast %70 : f32 to vector<2x25xf32>
    %74 = arith.mulf %73, %72 : vector<2x25xf32>
    %c15 = arith.constant 15 : index
    %75 = memref.load %arg0[%c15] : memref<96xf32, #tpu.memory_space<smem>>
    %c15_45 = arith.constant 15 : index
    %c0_46 = arith.constant 0 : index
    %c0_47 = arith.constant 0 : index
    %76 = vector.load %arg2[%c15_45, %c0_46, %c0_47] : memref<24x2x25xf32, #tpu.memory_space<vmem>>, vector<1x2x25xf32>
    %77 = vector.shape_cast %76 : vector<1x2x25xf32> to vector<2x25xf32>
    %78 = vector.broadcast %75 : f32 to vector<2x25xf32>
    %79 = arith.mulf %78, %77 : vector<2x25xf32>
    %c16 = arith.constant 16 : index
    %80 = memref.load %arg0[%c16] : memref<96xf32, #tpu.memory_space<smem>>
    %c16_48 = arith.constant 16 : index
    %c0_49 = arith.constant 0 : index
    %c0_50 = arith.constant 0 : index
    %81 = vector.load %arg2[%c16_48, %c0_49, %c0_50] : memref<24x2x25xf32, #tpu.memory_space<vmem>>, vector<1x2x25xf32>
    %82 = vector.shape_cast %81 : vector<1x2x25xf32> to vector<2x25xf32>
    %83 = vector.broadcast %80 : f32 to vector<2x25xf32>
    %84 = arith.mulf %83, %82 : vector<2x25xf32>
    %c17 = arith.constant 17 : index
    %85 = memref.load %arg0[%c17] : memref<96xf32, #tpu.memory_space<smem>>
    %c17_51 = arith.constant 17 : index
    %c0_52 = arith.constant 0 : index
    %c0_53 = arith.constant 0 : index
    %86 = vector.load %arg2[%c17_51, %c0_52, %c0_53] : memref<24x2x25xf32, #tpu.memory_space<vmem>>, vector<1x2x25xf32>
    %87 = vector.shape_cast %86 : vector<1x2x25xf32> to vector<2x25xf32>
    %88 = vector.broadcast %85 : f32 to vector<2x25xf32>
    %89 = arith.mulf %88, %87 : vector<2x25xf32>
    %c18 = arith.constant 18 : index
    %90 = memref.load %arg0[%c18] : memref<96xf32, #tpu.memory_space<smem>>
    %c18_54 = arith.constant 18 : index
    %c0_55 = arith.constant 0 : index
    %c0_56 = arith.constant 0 : index
    %91 = vector.load %arg2[%c18_54, %c0_55, %c0_56] : memref<24x2x25xf32, #tpu.memory_space<vmem>>, vector<1x2x25xf32>
    %92 = vector.shape_cast %91 : vector<1x2x25xf32> to vector<2x25xf32>
    %93 = vector.broadcast %90 : f32 to vector<2x25xf32>
    %94 = arith.mulf %93, %92 : vector<2x25xf32>
    %c19 = arith.constant 19 : index
    %95 = memref.load %arg0[%c19] : memref<96xf32, #tpu.memory_space<smem>>
    %c19_57 = arith.constant 19 : index
    %c0_58 = arith.constant 0 : index
    %c0_59 = arith.constant 0 : index
    %96 = vector.load %arg2[%c19_57, %c0_58, %c0_59] : memref<24x2x25xf32, #tpu.memory_space<vmem>>, vector<1x2x25xf32>
    %97 = vector.shape_cast %96 : vector<1x2x25xf32> to vector<2x25xf32>
    %98 = vector.broadcast %95 : f32 to vector<2x25xf32>
    %99 = arith.mulf %98, %97 : vector<2x25xf32>
    %c20 = arith.constant 20 : index
    %100 = memref.load %arg0[%c20] : memref<96xf32, #tpu.memory_space<smem>>
    %c20_60 = arith.constant 20 : index
    %c0_61 = arith.constant 0 : index
    %c0_62 = arith.constant 0 : index
    %101 = vector.load %arg2[%c20_60, %c0_61, %c0_62] : memref<24x2x25xf32, #tpu.memory_space<vmem>>, vector<1x2x25xf32>
    %102 = vector.shape_cast %101 : vector<1x2x25xf32> to vector<2x25xf32>
    %103 = vector.broadcast %100 : f32 to vector<2x25xf32>
    %104 = arith.mulf %103, %102 : vector<2x25xf32>
    %c21 = arith.constant 21 : index
    %105 = memref.load %arg0[%c21] : memref<96xf32, #tpu.memory_space<smem>>
    %c21_63 = arith.constant 21 : index
    %c0_64 = arith.constant 0 : index
    %c0_65 = arith.constant 0 : index
    %106 = vector.load %arg2[%c21_63, %c0_64, %c0_65] : memref<24x2x25xf32, #tpu.memory_space<vmem>>, vector<1x2x25xf32>
    %107 = vector.shape_cast %106 : vector<1x2x25xf32> to vector<2x25xf32>
    %108 = vector.broadcast %105 : f32 to vector<2x25xf32>
    %109 = arith.mulf %108, %107 : vector<2x25xf32>
    %c22 = arith.constant 22 : index
    %110 = memref.load %arg0[%c22] : memref<96xf32, #tpu.memory_space<smem>>
    %c22_66 = arith.constant 22 : index
    %c0_67 = arith.constant 0 : index
    %c0_68 = arith.constant 0 : index
    %111 = vector.load %arg2[%c22_66, %c0_67, %c0_68] : memref<24x2x25xf32, #tpu.memory_space<vmem>>, vector<1x2x25xf32>
    %112 = vector.shape_cast %111 : vector<1x2x25xf32> to vector<2x25xf32>
    %113 = vector.broadcast %110 : f32 to vector<2x25xf32>
    %114 = arith.mulf %113, %112 : vector<2x25xf32>
    %c23 = arith.constant 23 : index
    %115 = memref.load %arg0[%c23] : memref<96xf32, #tpu.memory_space<smem>>
    %c23_69 = arith.constant 23 : index
    %c0_70 = arith.constant 0 : index
    %c0_71 = arith.constant 0 : index
    %116 = vector.load %arg2[%c23_69, %c0_70, %c0_71] : memref<24x2x25xf32, #tpu.memory_space<vmem>>, vector<1x2x25xf32>
    %117 = vector.shape_cast %116 : vector<1x2x25xf32> to vector<2x25xf32>
    %118 = vector.broadcast %115 : f32 to vector<2x25xf32>
    %119 = arith.mulf %118, %117 : vector<2x25xf32>
    %120 = arith.addf %4, %9 : vector<2x25xf32>
    %121 = arith.addf %14, %19 : vector<2x25xf32>
    %122 = arith.addf %24, %29 : vector<2x25xf32>
    %123 = arith.addf %34, %39 : vector<2x25xf32>
    %124 = arith.addf %44, %49 : vector<2x25xf32>
    %125 = arith.addf %54, %59 : vector<2x25xf32>
    %126 = arith.addf %64, %69 : vector<2x25xf32>
    %127 = arith.addf %74, %79 : vector<2x25xf32>
    %128 = arith.addf %84, %89 : vector<2x25xf32>
    %129 = arith.addf %94, %99 : vector<2x25xf32>
    %130 = arith.addf %104, %109 : vector<2x25xf32>
    %131 = arith.addf %114, %119 : vector<2x25xf32>
    %132 = arith.addf %120, %121 : vector<2x25xf32>
    %133 = arith.addf %122, %123 : vector<2x25xf32>
    %134 = arith.addf %124, %125 : vector<2x25xf32>
    %135 = arith.addf %126, %127 : vector<2x25xf32>
    %136 = arith.addf %128, %129 : vector<2x25xf32>
    %137 = arith.addf %130, %131 : vector<2x25xf32>
    %138 = arith.addf %132, %133 : vector<2x25xf32>
    %139 = arith.addf %134, %135 : vector<2x25xf32>
    %140 = arith.addf %136, %137 : vector<2x25xf32>
    %141 = arith.addf %138, %139 : vector<2x25xf32>
    %142 = arith.addf %141, %140 : vector<2x25xf32>
    %cst = arith.constant 0.000000e+00 : f32
    %143 = vector.broadcast %cst : f32 to vector<2x25xf32>
    %144 = arith.maximumf %142, %143 : vector<2x25xf32>
    %c0_72 = arith.constant 0 : index
    %c0_73 = arith.constant 0 : index
    %c0_74 = arith.constant 0 : index
    %145 = vector.load %arg3[%c0_72, %c0_73, %c0_74] : memref<4x1x25xf32, #tpu.memory_space<vmem>>, vector<1x1x25xf32>
    %146 = vector.shape_cast %145 : vector<1x1x25xf32> to vector<1x25xf32>
    %147 = vector.broadcast %146 : vector<1x25xf32> to vector<2x25xf32>
    %148 = arith.mulf %144, %147 : vector<2x25xf32>
    %c24 = arith.constant 24 : index
    %149 = memref.load %arg0[%c24] : memref<96xf32, #tpu.memory_space<smem>>
    %c0_75 = arith.constant 0 : index
    %c0_76 = arith.constant 0 : index
    %c0_77 = arith.constant 0 : index
    %150 = vector.load %arg2[%c0_75, %c0_76, %c0_77] : memref<24x2x25xf32, #tpu.memory_space<vmem>>, vector<1x2x25xf32>
    %151 = vector.shape_cast %150 : vector<1x2x25xf32> to vector<2x25xf32>
    %152 = vector.broadcast %149 : f32 to vector<2x25xf32>
    %153 = arith.mulf %152, %151 : vector<2x25xf32>
    %c25 = arith.constant 25 : index
    %154 = memref.load %arg0[%c25] : memref<96xf32, #tpu.memory_space<smem>>
    %c1_78 = arith.constant 1 : index
    %c0_79 = arith.constant 0 : index
    %c0_80 = arith.constant 0 : index
    %155 = vector.load %arg2[%c1_78, %c0_79, %c0_80] : memref<24x2x25xf32, #tpu.memory_space<vmem>>, vector<1x2x25xf32>
    %156 = vector.shape_cast %155 : vector<1x2x25xf32> to vector<2x25xf32>
    %157 = vector.broadcast %154 : f32 to vector<2x25xf32>
    %158 = arith.mulf %157, %156 : vector<2x25xf32>
    %c26 = arith.constant 26 : index
    %159 = memref.load %arg0[%c26] : memref<96xf32, #tpu.memory_space<smem>>
    %c2_81 = arith.constant 2 : index
    %c0_82 = arith.constant 0 : index
    %c0_83 = arith.constant 0 : index
    %160 = vector.load %arg2[%c2_81, %c0_82, %c0_83] : memref<24x2x25xf32, #tpu.memory_space<vmem>>, vector<1x2x25xf32>
    %161 = vector.shape_cast %160 : vector<1x2x25xf32> to vector<2x25xf32>
    %162 = vector.broadcast %159 : f32 to vector<2x25xf32>
    %163 = arith.mulf %162, %161 : vector<2x25xf32>
    %c27 = arith.constant 27 : index
    %164 = memref.load %arg0[%c27] : memref<96xf32, #tpu.memory_space<smem>>
    %c3_84 = arith.constant 3 : index
    %c0_85 = arith.constant 0 : index
    %c0_86 = arith.constant 0 : index
    %165 = vector.load %arg2[%c3_84, %c0_85, %c0_86] : memref<24x2x25xf32, #tpu.memory_space<vmem>>, vector<1x2x25xf32>
    %166 = vector.shape_cast %165 : vector<1x2x25xf32> to vector<2x25xf32>
    %167 = vector.broadcast %164 : f32 to vector<2x25xf32>
    %168 = arith.mulf %167, %166 : vector<2x25xf32>
    %c28 = arith.constant 28 : index
    %169 = memref.load %arg0[%c28] : memref<96xf32, #tpu.memory_space<smem>>
    %c4_87 = arith.constant 4 : index
    %c0_88 = arith.constant 0 : index
    %c0_89 = arith.constant 0 : index
    %170 = vector.load %arg2[%c4_87, %c0_88, %c0_89] : memref<24x2x25xf32, #tpu.memory_space<vmem>>, vector<1x2x25xf32>
    %171 = vector.shape_cast %170 : vector<1x2x25xf32> to vector<2x25xf32>
    %172 = vector.broadcast %169 : f32 to vector<2x25xf32>
    %173 = arith.mulf %172, %171 : vector<2x25xf32>
    %c29 = arith.constant 29 : index
    %174 = memref.load %arg0[%c29] : memref<96xf32, #tpu.memory_space<smem>>
    %c5_90 = arith.constant 5 : index
    %c0_91 = arith.constant 0 : index
    %c0_92 = arith.constant 0 : index
    %175 = vector.load %arg2[%c5_90, %c0_91, %c0_92] : memref<24x2x25xf32, #tpu.memory_space<vmem>>, vector<1x2x25xf32>
    %176 = vector.shape_cast %175 : vector<1x2x25xf32> to vector<2x25xf32>
    %177 = vector.broadcast %174 : f32 to vector<2x25xf32>
    %178 = arith.mulf %177, %176 : vector<2x25xf32>
    %c30 = arith.constant 30 : index
    %179 = memref.load %arg0[%c30] : memref<96xf32, #tpu.memory_space<smem>>
    %c6_93 = arith.constant 6 : index
    %c0_94 = arith.constant 0 : index
    %c0_95 = arith.constant 0 : index
    %180 = vector.load %arg2[%c6_93, %c0_94, %c0_95] : memref<24x2x25xf32, #tpu.memory_space<vmem>>, vector<1x2x25xf32>
    %181 = vector.shape_cast %180 : vector<1x2x25xf32> to vector<2x25xf32>
    %182 = vector.broadcast %179 : f32 to vector<2x25xf32>
    %183 = arith.mulf %182, %181 : vector<2x25xf32>
    %c31 = arith.constant 31 : index
    %184 = memref.load %arg0[%c31] : memref<96xf32, #tpu.memory_space<smem>>
    %c7_96 = arith.constant 7 : index
    %c0_97 = arith.constant 0 : index
    %c0_98 = arith.constant 0 : index
    %185 = vector.load %arg2[%c7_96, %c0_97, %c0_98] : memref<24x2x25xf32, #tpu.memory_space<vmem>>, vector<1x2x25xf32>
    %186 = vector.shape_cast %185 : vector<1x2x25xf32> to vector<2x25xf32>
    %187 = vector.broadcast %184 : f32 to vector<2x25xf32>
    %188 = arith.mulf %187, %186 : vector<2x25xf32>
    %c32 = arith.constant 32 : index
    %189 = memref.load %arg0[%c32] : memref<96xf32, #tpu.memory_space<smem>>
    %c8_99 = arith.constant 8 : index
    %c0_100 = arith.constant 0 : index
    %c0_101 = arith.constant 0 : index
    %190 = vector.load %arg2[%c8_99, %c0_100, %c0_101] : memref<24x2x25xf32, #tpu.memory_space<vmem>>, vector<1x2x25xf32>
    %191 = vector.shape_cast %190 : vector<1x2x25xf32> to vector<2x25xf32>
    %192 = vector.broadcast %189 : f32 to vector<2x25xf32>
    %193 = arith.mulf %192, %191 : vector<2x25xf32>
    %c33 = arith.constant 33 : index
    %194 = memref.load %arg0[%c33] : memref<96xf32, #tpu.memory_space<smem>>
    %c9_102 = arith.constant 9 : index
    %c0_103 = arith.constant 0 : index
    %c0_104 = arith.constant 0 : index
    %195 = vector.load %arg2[%c9_102, %c0_103, %c0_104] : memref<24x2x25xf32, #tpu.memory_space<vmem>>, vector<1x2x25xf32>
    %196 = vector.shape_cast %195 : vector<1x2x25xf32> to vector<2x25xf32>
    %197 = vector.broadcast %194 : f32 to vector<2x25xf32>
    %198 = arith.mulf %197, %196 : vector<2x25xf32>
    %c34 = arith.constant 34 : index
    %199 = memref.load %arg0[%c34] : memref<96xf32, #tpu.memory_space<smem>>
    %c10_105 = arith.constant 10 : index
    %c0_106 = arith.constant 0 : index
    %c0_107 = arith.constant 0 : index
    %200 = vector.load %arg2[%c10_105, %c0_106, %c0_107] : memref<24x2x25xf32, #tpu.memory_space<vmem>>, vector<1x2x25xf32>
    %201 = vector.shape_cast %200 : vector<1x2x25xf32> to vector<2x25xf32>
    %202 = vector.broadcast %199 : f32 to vector<2x25xf32>
    %203 = arith.mulf %202, %201 : vector<2x25xf32>
    %c35 = arith.constant 35 : index
    %204 = memref.load %arg0[%c35] : memref<96xf32, #tpu.memory_space<smem>>
    %c11_108 = arith.constant 11 : index
    %c0_109 = arith.constant 0 : index
    %c0_110 = arith.constant 0 : index
    %205 = vector.load %arg2[%c11_108, %c0_109, %c0_110] : memref<24x2x25xf32, #tpu.memory_space<vmem>>, vector<1x2x25xf32>
    %206 = vector.shape_cast %205 : vector<1x2x25xf32> to vector<2x25xf32>
    %207 = vector.broadcast %204 : f32 to vector<2x25xf32>
    %208 = arith.mulf %207, %206 : vector<2x25xf32>
    %c36 = arith.constant 36 : index
    %209 = memref.load %arg0[%c36] : memref<96xf32, #tpu.memory_space<smem>>
    %c12_111 = arith.constant 12 : index
    %c0_112 = arith.constant 0 : index
    %c0_113 = arith.constant 0 : index
    %210 = vector.load %arg2[%c12_111, %c0_112, %c0_113] : memref<24x2x25xf32, #tpu.memory_space<vmem>>, vector<1x2x25xf32>
    %211 = vector.shape_cast %210 : vector<1x2x25xf32> to vector<2x25xf32>
    %212 = vector.broadcast %209 : f32 to vector<2x25xf32>
    %213 = arith.mulf %212, %211 : vector<2x25xf32>
    %c37 = arith.constant 37 : index
    %214 = memref.load %arg0[%c37] : memref<96xf32, #tpu.memory_space<smem>>
    %c13_114 = arith.constant 13 : index
    %c0_115 = arith.constant 0 : index
    %c0_116 = arith.constant 0 : index
    %215 = vector.load %arg2[%c13_114, %c0_115, %c0_116] : memref<24x2x25xf32, #tpu.memory_space<vmem>>, vector<1x2x25xf32>
    %216 = vector.shape_cast %215 : vector<1x2x25xf32> to vector<2x25xf32>
    %217 = vector.broadcast %214 : f32 to vector<2x25xf32>
    %218 = arith.mulf %217, %216 : vector<2x25xf32>
    %c38 = arith.constant 38 : index
    %219 = memref.load %arg0[%c38] : memref<96xf32, #tpu.memory_space<smem>>
    %c14_117 = arith.constant 14 : index
    %c0_118 = arith.constant 0 : index
    %c0_119 = arith.constant 0 : index
    %220 = vector.load %arg2[%c14_117, %c0_118, %c0_119] : memref<24x2x25xf32, #tpu.memory_space<vmem>>, vector<1x2x25xf32>
    %221 = vector.shape_cast %220 : vector<1x2x25xf32> to vector<2x25xf32>
    %222 = vector.broadcast %219 : f32 to vector<2x25xf32>
    %223 = arith.mulf %222, %221 : vector<2x25xf32>
    %c39 = arith.constant 39 : index
    %224 = memref.load %arg0[%c39] : memref<96xf32, #tpu.memory_space<smem>>
    %c15_120 = arith.constant 15 : index
    %c0_121 = arith.constant 0 : index
    %c0_122 = arith.constant 0 : index
    %225 = vector.load %arg2[%c15_120, %c0_121, %c0_122] : memref<24x2x25xf32, #tpu.memory_space<vmem>>, vector<1x2x25xf32>
    %226 = vector.shape_cast %225 : vector<1x2x25xf32> to vector<2x25xf32>
    %227 = vector.broadcast %224 : f32 to vector<2x25xf32>
    %228 = arith.mulf %227, %226 : vector<2x25xf32>
    %c40 = arith.constant 40 : index
    %229 = memref.load %arg0[%c40] : memref<96xf32, #tpu.memory_space<smem>>
    %c16_123 = arith.constant 16 : index
    %c0_124 = arith.constant 0 : index
    %c0_125 = arith.constant 0 : index
    %230 = vector.load %arg2[%c16_123, %c0_124, %c0_125] : memref<24x2x25xf32, #tpu.memory_space<vmem>>, vector<1x2x25xf32>
    %231 = vector.shape_cast %230 : vector<1x2x25xf32> to vector<2x25xf32>
    %232 = vector.broadcast %229 : f32 to vector<2x25xf32>
    %233 = arith.mulf %232, %231 : vector<2x25xf32>
    %c41 = arith.constant 41 : index
    %234 = memref.load %arg0[%c41] : memref<96xf32, #tpu.memory_space<smem>>
    %c17_126 = arith.constant 17 : index
    %c0_127 = arith.constant 0 : index
    %c0_128 = arith.constant 0 : index
    %235 = vector.load %arg2[%c17_126, %c0_127, %c0_128] : memref<24x2x25xf32, #tpu.memory_space<vmem>>, vector<1x2x25xf32>
    %236 = vector.shape_cast %235 : vector<1x2x25xf32> to vector<2x25xf32>
    %237 = vector.broadcast %234 : f32 to vector<2x25xf32>
    %238 = arith.mulf %237, %236 : vector<2x25xf32>
    %c42 = arith.constant 42 : index
    %239 = memref.load %arg0[%c42] : memref<96xf32, #tpu.memory_space<smem>>
    %c18_129 = arith.constant 18 : index
    %c0_130 = arith.constant 0 : index
    %c0_131 = arith.constant 0 : index
    %240 = vector.load %arg2[%c18_129, %c0_130, %c0_131] : memref<24x2x25xf32, #tpu.memory_space<vmem>>, vector<1x2x25xf32>
    %241 = vector.shape_cast %240 : vector<1x2x25xf32> to vector<2x25xf32>
    %242 = vector.broadcast %239 : f32 to vector<2x25xf32>
    %243 = arith.mulf %242, %241 : vector<2x25xf32>
    %c43 = arith.constant 43 : index
    %244 = memref.load %arg0[%c43] : memref<96xf32, #tpu.memory_space<smem>>
    %c19_132 = arith.constant 19 : index
    %c0_133 = arith.constant 0 : index
    %c0_134 = arith.constant 0 : index
    %245 = vector.load %arg2[%c19_132, %c0_133, %c0_134] : memref<24x2x25xf32, #tpu.memory_space<vmem>>, vector<1x2x25xf32>
    %246 = vector.shape_cast %245 : vector<1x2x25xf32> to vector<2x25xf32>
    %247 = vector.broadcast %244 : f32 to vector<2x25xf32>
    %248 = arith.mulf %247, %246 : vector<2x25xf32>
    %c44 = arith.constant 44 : index
    %249 = memref.load %arg0[%c44] : memref<96xf32, #tpu.memory_space<smem>>
    %c20_135 = arith.constant 20 : index
    %c0_136 = arith.constant 0 : index
    %c0_137 = arith.constant 0 : index
    %250 = vector.load %arg2[%c20_135, %c0_136, %c0_137] : memref<24x2x25xf32, #tpu.memory_space<vmem>>, vector<1x2x25xf32>
    %251 = vector.shape_cast %250 : vector<1x2x25xf32> to vector<2x25xf32>
    %252 = vector.broadcast %249 : f32 to vector<2x25xf32>
    %253 = arith.mulf %252, %251 : vector<2x25xf32>
    %c45 = arith.constant 45 : index
    %254 = memref.load %arg0[%c45] : memref<96xf32, #tpu.memory_space<smem>>
    %c21_138 = arith.constant 21 : index
    %c0_139 = arith.constant 0 : index
    %c0_140 = arith.constant 0 : index
    %255 = vector.load %arg2[%c21_138, %c0_139, %c0_140] : memref<24x2x25xf32, #tpu.memory_space<vmem>>, vector<1x2x25xf32>
    %256 = vector.shape_cast %255 : vector<1x2x25xf32> to vector<2x25xf32>
    %257 = vector.broadcast %254 : f32 to vector<2x25xf32>
    %258 = arith.mulf %257, %256 : vector<2x25xf32>
    %c46 = arith.constant 46 : index
    %259 = memref.load %arg0[%c46] : memref<96xf32, #tpu.memory_space<smem>>
    %c22_141 = arith.constant 22 : index
    %c0_142 = arith.constant 0 : index
    %c0_143 = arith.constant 0 : index
    %260 = vector.load %arg2[%c22_141, %c0_142, %c0_143] : memref<24x2x25xf32, #tpu.memory_space<vmem>>, vector<1x2x25xf32>
    %261 = vector.shape_cast %260 : vector<1x2x25xf32> to vector<2x25xf32>
    %262 = vector.broadcast %259 : f32 to vector<2x25xf32>
    %263 = arith.mulf %262, %261 : vector<2x25xf32>
    %c47 = arith.constant 47 : index
    %264 = memref.load %arg0[%c47] : memref<96xf32, #tpu.memory_space<smem>>
    %c23_144 = arith.constant 23 : index
    %c0_145 = arith.constant 0 : index
    %c0_146 = arith.constant 0 : index
    %265 = vector.load %arg2[%c23_144, %c0_145, %c0_146] : memref<24x2x25xf32, #tpu.memory_space<vmem>>, vector<1x2x25xf32>
    %266 = vector.shape_cast %265 : vector<1x2x25xf32> to vector<2x25xf32>
    %267 = vector.broadcast %264 : f32 to vector<2x25xf32>
    %268 = arith.mulf %267, %266 : vector<2x25xf32>
    %269 = arith.addf %153, %158 : vector<2x25xf32>
    %270 = arith.addf %163, %168 : vector<2x25xf32>
    %271 = arith.addf %173, %178 : vector<2x25xf32>
    %272 = arith.addf %183, %188 : vector<2x25xf32>
    %273 = arith.addf %193, %198 : vector<2x25xf32>
    %274 = arith.addf %203, %208 : vector<2x25xf32>
    %275 = arith.addf %213, %218 : vector<2x25xf32>
    %276 = arith.addf %223, %228 : vector<2x25xf32>
    %277 = arith.addf %233, %238 : vector<2x25xf32>
    %278 = arith.addf %243, %248 : vector<2x25xf32>
    %279 = arith.addf %253, %258 : vector<2x25xf32>
    %280 = arith.addf %263, %268 : vector<2x25xf32>
    %281 = arith.addf %269, %270 : vector<2x25xf32>
    %282 = arith.addf %271, %272 : vector<2x25xf32>
    %283 = arith.addf %273, %274 : vector<2x25xf32>
    %284 = arith.addf %275, %276 : vector<2x25xf32>
    %285 = arith.addf %277, %278 : vector<2x25xf32>
    %286 = arith.addf %279, %280 : vector<2x25xf32>
    %287 = arith.addf %281, %282 : vector<2x25xf32>
    %288 = arith.addf %283, %284 : vector<2x25xf32>
    %289 = arith.addf %285, %286 : vector<2x25xf32>
    %290 = arith.addf %287, %288 : vector<2x25xf32>
    %291 = arith.addf %290, %289 : vector<2x25xf32>
    %cst_147 = arith.constant 0.000000e+00 : f32
    %292 = vector.broadcast %cst_147 : f32 to vector<2x25xf32>
    %293 = arith.maximumf %291, %292 : vector<2x25xf32>
    %c1_148 = arith.constant 1 : index
    %c0_149 = arith.constant 0 : index
    %c0_150 = arith.constant 0 : index
    %294 = vector.load %arg3[%c1_148, %c0_149, %c0_150] : memref<4x1x25xf32, #tpu.memory_space<vmem>>, vector<1x1x25xf32>
    %295 = vector.shape_cast %294 : vector<1x1x25xf32> to vector<1x25xf32>
    %296 = vector.broadcast %295 : vector<1x25xf32> to vector<2x25xf32>
    %297 = arith.mulf %293, %296 : vector<2x25xf32>
    %c48 = arith.constant 48 : index
    %298 = memref.load %arg0[%c48] : memref<96xf32, #tpu.memory_space<smem>>
    %c0_151 = arith.constant 0 : index
    %c0_152 = arith.constant 0 : index
    %c0_153 = arith.constant 0 : index
    %299 = vector.load %arg2[%c0_151, %c0_152, %c0_153] : memref<24x2x25xf32, #tpu.memory_space<vmem>>, vector<1x2x25xf32>
    %300 = vector.shape_cast %299 : vector<1x2x25xf32> to vector<2x25xf32>
    %301 = vector.broadcast %298 : f32 to vector<2x25xf32>
    %302 = arith.mulf %301, %300 : vector<2x25xf32>
    %c49 = arith.constant 49 : index
    %303 = memref.load %arg0[%c49] : memref<96xf32, #tpu.memory_space<smem>>
    %c1_154 = arith.constant 1 : index
    %c0_155 = arith.constant 0 : index
    %c0_156 = arith.constant 0 : index
    %304 = vector.load %arg2[%c1_154, %c0_155, %c0_156] : memref<24x2x25xf32, #tpu.memory_space<vmem>>, vector<1x2x25xf32>
    %305 = vector.shape_cast %304 : vector<1x2x25xf32> to vector<2x25xf32>
    %306 = vector.broadcast %303 : f32 to vector<2x25xf32>
    %307 = arith.mulf %306, %305 : vector<2x25xf32>
    %c50 = arith.constant 50 : index
    %308 = memref.load %arg0[%c50] : memref<96xf32, #tpu.memory_space<smem>>
    %c2_157 = arith.constant 2 : index
    %c0_158 = arith.constant 0 : index
    %c0_159 = arith.constant 0 : index
    %309 = vector.load %arg2[%c2_157, %c0_158, %c0_159] : memref<24x2x25xf32, #tpu.memory_space<vmem>>, vector<1x2x25xf32>
    %310 = vector.shape_cast %309 : vector<1x2x25xf32> to vector<2x25xf32>
    %311 = vector.broadcast %308 : f32 to vector<2x25xf32>
    %312 = arith.mulf %311, %310 : vector<2x25xf32>
    %c51 = arith.constant 51 : index
    %313 = memref.load %arg0[%c51] : memref<96xf32, #tpu.memory_space<smem>>
    %c3_160 = arith.constant 3 : index
    %c0_161 = arith.constant 0 : index
    %c0_162 = arith.constant 0 : index
    %314 = vector.load %arg2[%c3_160, %c0_161, %c0_162] : memref<24x2x25xf32, #tpu.memory_space<vmem>>, vector<1x2x25xf32>
    %315 = vector.shape_cast %314 : vector<1x2x25xf32> to vector<2x25xf32>
    %316 = vector.broadcast %313 : f32 to vector<2x25xf32>
    %317 = arith.mulf %316, %315 : vector<2x25xf32>
    %c52 = arith.constant 52 : index
    %318 = memref.load %arg0[%c52] : memref<96xf32, #tpu.memory_space<smem>>
    %c4_163 = arith.constant 4 : index
    %c0_164 = arith.constant 0 : index
    %c0_165 = arith.constant 0 : index
    %319 = vector.load %arg2[%c4_163, %c0_164, %c0_165] : memref<24x2x25xf32, #tpu.memory_space<vmem>>, vector<1x2x25xf32>
    %320 = vector.shape_cast %319 : vector<1x2x25xf32> to vector<2x25xf32>
    %321 = vector.broadcast %318 : f32 to vector<2x25xf32>
    %322 = arith.mulf %321, %320 : vector<2x25xf32>
    %c53 = arith.constant 53 : index
    %323 = memref.load %arg0[%c53] : memref<96xf32, #tpu.memory_space<smem>>
    %c5_166 = arith.constant 5 : index
    %c0_167 = arith.constant 0 : index
    %c0_168 = arith.constant 0 : index
    %324 = vector.load %arg2[%c5_166, %c0_167, %c0_168] : memref<24x2x25xf32, #tpu.memory_space<vmem>>, vector<1x2x25xf32>
    %325 = vector.shape_cast %324 : vector<1x2x25xf32> to vector<2x25xf32>
    %326 = vector.broadcast %323 : f32 to vector<2x25xf32>
    %327 = arith.mulf %326, %325 : vector<2x25xf32>
    %c54 = arith.constant 54 : index
    %328 = memref.load %arg0[%c54] : memref<96xf32, #tpu.memory_space<smem>>
    %c6_169 = arith.constant 6 : index
    %c0_170 = arith.constant 0 : index
    %c0_171 = arith.constant 0 : index
    %329 = vector.load %arg2[%c6_169, %c0_170, %c0_171] : memref<24x2x25xf32, #tpu.memory_space<vmem>>, vector<1x2x25xf32>
    %330 = vector.shape_cast %329 : vector<1x2x25xf32> to vector<2x25xf32>
    %331 = vector.broadcast %328 : f32 to vector<2x25xf32>
    %332 = arith.mulf %331, %330 : vector<2x25xf32>
    %c55 = arith.constant 55 : index
    %333 = memref.load %arg0[%c55] : memref<96xf32, #tpu.memory_space<smem>>
    %c7_172 = arith.constant 7 : index
    %c0_173 = arith.constant 0 : index
    %c0_174 = arith.constant 0 : index
    %334 = vector.load %arg2[%c7_172, %c0_173, %c0_174] : memref<24x2x25xf32, #tpu.memory_space<vmem>>, vector<1x2x25xf32>
    %335 = vector.shape_cast %334 : vector<1x2x25xf32> to vector<2x25xf32>
    %336 = vector.broadcast %333 : f32 to vector<2x25xf32>
    %337 = arith.mulf %336, %335 : vector<2x25xf32>
    %c56 = arith.constant 56 : index
    %338 = memref.load %arg0[%c56] : memref<96xf32, #tpu.memory_space<smem>>
    %c8_175 = arith.constant 8 : index
    %c0_176 = arith.constant 0 : index
    %c0_177 = arith.constant 0 : index
    %339 = vector.load %arg2[%c8_175, %c0_176, %c0_177] : memref<24x2x25xf32, #tpu.memory_space<vmem>>, vector<1x2x25xf32>
    %340 = vector.shape_cast %339 : vector<1x2x25xf32> to vector<2x25xf32>
    %341 = vector.broadcast %338 : f32 to vector<2x25xf32>
    %342 = arith.mulf %341, %340 : vector<2x25xf32>
    %c57 = arith.constant 57 : index
    %343 = memref.load %arg0[%c57] : memref<96xf32, #tpu.memory_space<smem>>
    %c9_178 = arith.constant 9 : index
    %c0_179 = arith.constant 0 : index
    %c0_180 = arith.constant 0 : index
    %344 = vector.load %arg2[%c9_178, %c0_179, %c0_180] : memref<24x2x25xf32, #tpu.memory_space<vmem>>, vector<1x2x25xf32>
    %345 = vector.shape_cast %344 : vector<1x2x25xf32> to vector<2x25xf32>
    %346 = vector.broadcast %343 : f32 to vector<2x25xf32>
    %347 = arith.mulf %346, %345 : vector<2x25xf32>
    %c58 = arith.constant 58 : index
    %348 = memref.load %arg0[%c58] : memref<96xf32, #tpu.memory_space<smem>>
    %c10_181 = arith.constant 10 : index
    %c0_182 = arith.constant 0 : index
    %c0_183 = arith.constant 0 : index
    %349 = vector.load %arg2[%c10_181, %c0_182, %c0_183] : memref<24x2x25xf32, #tpu.memory_space<vmem>>, vector<1x2x25xf32>
    %350 = vector.shape_cast %349 : vector<1x2x25xf32> to vector<2x25xf32>
    %351 = vector.broadcast %348 : f32 to vector<2x25xf32>
    %352 = arith.mulf %351, %350 : vector<2x25xf32>
    %c59 = arith.constant 59 : index
    %353 = memref.load %arg0[%c59] : memref<96xf32, #tpu.memory_space<smem>>
    %c11_184 = arith.constant 11 : index
    %c0_185 = arith.constant 0 : index
    %c0_186 = arith.constant 0 : index
    %354 = vector.load %arg2[%c11_184, %c0_185, %c0_186] : memref<24x2x25xf32, #tpu.memory_space<vmem>>, vector<1x2x25xf32>
    %355 = vector.shape_cast %354 : vector<1x2x25xf32> to vector<2x25xf32>
    %356 = vector.broadcast %353 : f32 to vector<2x25xf32>
    %357 = arith.mulf %356, %355 : vector<2x25xf32>
    %c60 = arith.constant 60 : index
    %358 = memref.load %arg0[%c60] : memref<96xf32, #tpu.memory_space<smem>>
    %c12_187 = arith.constant 12 : index
    %c0_188 = arith.constant 0 : index
    %c0_189 = arith.constant 0 : index
    %359 = vector.load %arg2[%c12_187, %c0_188, %c0_189] : memref<24x2x25xf32, #tpu.memory_space<vmem>>, vector<1x2x25xf32>
    %360 = vector.shape_cast %359 : vector<1x2x25xf32> to vector<2x25xf32>
    %361 = vector.broadcast %358 : f32 to vector<2x25xf32>
    %362 = arith.mulf %361, %360 : vector<2x25xf32>
    %c61 = arith.constant 61 : index
    %363 = memref.load %arg0[%c61] : memref<96xf32, #tpu.memory_space<smem>>
    %c13_190 = arith.constant 13 : index
    %c0_191 = arith.constant 0 : index
    %c0_192 = arith.constant 0 : index
    %364 = vector.load %arg2[%c13_190, %c0_191, %c0_192] : memref<24x2x25xf32, #tpu.memory_space<vmem>>, vector<1x2x25xf32>
    %365 = vector.shape_cast %364 : vector<1x2x25xf32> to vector<2x25xf32>
    %366 = vector.broadcast %363 : f32 to vector<2x25xf32>
    %367 = arith.mulf %366, %365 : vector<2x25xf32>
    %c62 = arith.constant 62 : index
    %368 = memref.load %arg0[%c62] : memref<96xf32, #tpu.memory_space<smem>>
    %c14_193 = arith.constant 14 : index
    %c0_194 = arith.constant 0 : index
    %c0_195 = arith.constant 0 : index
    %369 = vector.load %arg2[%c14_193, %c0_194, %c0_195] : memref<24x2x25xf32, #tpu.memory_space<vmem>>, vector<1x2x25xf32>
    %370 = vector.shape_cast %369 : vector<1x2x25xf32> to vector<2x25xf32>
    %371 = vector.broadcast %368 : f32 to vector<2x25xf32>
    %372 = arith.mulf %371, %370 : vector<2x25xf32>
    %c63 = arith.constant 63 : index
    %373 = memref.load %arg0[%c63] : memref<96xf32, #tpu.memory_space<smem>>
    %c15_196 = arith.constant 15 : index
    %c0_197 = arith.constant 0 : index
    %c0_198 = arith.constant 0 : index
    %374 = vector.load %arg2[%c15_196, %c0_197, %c0_198] : memref<24x2x25xf32, #tpu.memory_space<vmem>>, vector<1x2x25xf32>
    %375 = vector.shape_cast %374 : vector<1x2x25xf32> to vector<2x25xf32>
    %376 = vector.broadcast %373 : f32 to vector<2x25xf32>
    %377 = arith.mulf %376, %375 : vector<2x25xf32>
    %c64 = arith.constant 64 : index
    %378 = memref.load %arg0[%c64] : memref<96xf32, #tpu.memory_space<smem>>
    %c16_199 = arith.constant 16 : index
    %c0_200 = arith.constant 0 : index
    %c0_201 = arith.constant 0 : index
    %379 = vector.load %arg2[%c16_199, %c0_200, %c0_201] : memref<24x2x25xf32, #tpu.memory_space<vmem>>, vector<1x2x25xf32>
    %380 = vector.shape_cast %379 : vector<1x2x25xf32> to vector<2x25xf32>
    %381 = vector.broadcast %378 : f32 to vector<2x25xf32>
    %382 = arith.mulf %381, %380 : vector<2x25xf32>
    %c65 = arith.constant 65 : index
    %383 = memref.load %arg0[%c65] : memref<96xf32, #tpu.memory_space<smem>>
    %c17_202 = arith.constant 17 : index
    %c0_203 = arith.constant 0 : index
    %c0_204 = arith.constant 0 : index
    %384 = vector.load %arg2[%c17_202, %c0_203, %c0_204] : memref<24x2x25xf32, #tpu.memory_space<vmem>>, vector<1x2x25xf32>
    %385 = vector.shape_cast %384 : vector<1x2x25xf32> to vector<2x25xf32>
    %386 = vector.broadcast %383 : f32 to vector<2x25xf32>
    %387 = arith.mulf %386, %385 : vector<2x25xf32>
    %c66 = arith.constant 66 : index
    %388 = memref.load %arg0[%c66] : memref<96xf32, #tpu.memory_space<smem>>
    %c18_205 = arith.constant 18 : index
    %c0_206 = arith.constant 0 : index
    %c0_207 = arith.constant 0 : index
    %389 = vector.load %arg2[%c18_205, %c0_206, %c0_207] : memref<24x2x25xf32, #tpu.memory_space<vmem>>, vector<1x2x25xf32>
    %390 = vector.shape_cast %389 : vector<1x2x25xf32> to vector<2x25xf32>
    %391 = vector.broadcast %388 : f32 to vector<2x25xf32>
    %392 = arith.mulf %391, %390 : vector<2x25xf32>
    %c67 = arith.constant 67 : index
    %393 = memref.load %arg0[%c67] : memref<96xf32, #tpu.memory_space<smem>>
    %c19_208 = arith.constant 19 : index
    %c0_209 = arith.constant 0 : index
    %c0_210 = arith.constant 0 : index
    %394 = vector.load %arg2[%c19_208, %c0_209, %c0_210] : memref<24x2x25xf32, #tpu.memory_space<vmem>>, vector<1x2x25xf32>
    %395 = vector.shape_cast %394 : vector<1x2x25xf32> to vector<2x25xf32>
    %396 = vector.broadcast %393 : f32 to vector<2x25xf32>
    %397 = arith.mulf %396, %395 : vector<2x25xf32>
    %c68 = arith.constant 68 : index
    %398 = memref.load %arg0[%c68] : memref<96xf32, #tpu.memory_space<smem>>
    %c20_211 = arith.constant 20 : index
    %c0_212 = arith.constant 0 : index
    %c0_213 = arith.constant 0 : index
    %399 = vector.load %arg2[%c20_211, %c0_212, %c0_213] : memref<24x2x25xf32, #tpu.memory_space<vmem>>, vector<1x2x25xf32>
    %400 = vector.shape_cast %399 : vector<1x2x25xf32> to vector<2x25xf32>
    %401 = vector.broadcast %398 : f32 to vector<2x25xf32>
    %402 = arith.mulf %401, %400 : vector<2x25xf32>
    %c69 = arith.constant 69 : index
    %403 = memref.load %arg0[%c69] : memref<96xf32, #tpu.memory_space<smem>>
    %c21_214 = arith.constant 21 : index
    %c0_215 = arith.constant 0 : index
    %c0_216 = arith.constant 0 : index
    %404 = vector.load %arg2[%c21_214, %c0_215, %c0_216] : memref<24x2x25xf32, #tpu.memory_space<vmem>>, vector<1x2x25xf32>
    %405 = vector.shape_cast %404 : vector<1x2x25xf32> to vector<2x25xf32>
    %406 = vector.broadcast %403 : f32 to vector<2x25xf32>
    %407 = arith.mulf %406, %405 : vector<2x25xf32>
    %c70 = arith.constant 70 : index
    %408 = memref.load %arg0[%c70] : memref<96xf32, #tpu.memory_space<smem>>
    %c22_217 = arith.constant 22 : index
    %c0_218 = arith.constant 0 : index
    %c0_219 = arith.constant 0 : index
    %409 = vector.load %arg2[%c22_217, %c0_218, %c0_219] : memref<24x2x25xf32, #tpu.memory_space<vmem>>, vector<1x2x25xf32>
    %410 = vector.shape_cast %409 : vector<1x2x25xf32> to vector<2x25xf32>
    %411 = vector.broadcast %408 : f32 to vector<2x25xf32>
    %412 = arith.mulf %411, %410 : vector<2x25xf32>
    %c71 = arith.constant 71 : index
    %413 = memref.load %arg0[%c71] : memref<96xf32, #tpu.memory_space<smem>>
    %c23_220 = arith.constant 23 : index
    %c0_221 = arith.constant 0 : index
    %c0_222 = arith.constant 0 : index
    %414 = vector.load %arg2[%c23_220, %c0_221, %c0_222] : memref<24x2x25xf32, #tpu.memory_space<vmem>>, vector<1x2x25xf32>
    %415 = vector.shape_cast %414 : vector<1x2x25xf32> to vector<2x25xf32>
    %416 = vector.broadcast %413 : f32 to vector<2x25xf32>
    %417 = arith.mulf %416, %415 : vector<2x25xf32>
    %418 = arith.addf %302, %307 : vector<2x25xf32>
    %419 = arith.addf %312, %317 : vector<2x25xf32>
    %420 = arith.addf %322, %327 : vector<2x25xf32>
    %421 = arith.addf %332, %337 : vector<2x25xf32>
    %422 = arith.addf %342, %347 : vector<2x25xf32>
    %423 = arith.addf %352, %357 : vector<2x25xf32>
    %424 = arith.addf %362, %367 : vector<2x25xf32>
    %425 = arith.addf %372, %377 : vector<2x25xf32>
    %426 = arith.addf %382, %387 : vector<2x25xf32>
    %427 = arith.addf %392, %397 : vector<2x25xf32>
    %428 = arith.addf %402, %407 : vector<2x25xf32>
    %429 = arith.addf %412, %417 : vector<2x25xf32>
    %430 = arith.addf %418, %419 : vector<2x25xf32>
    %431 = arith.addf %420, %421 : vector<2x25xf32>
    %432 = arith.addf %422, %423 : vector<2x25xf32>
    %433 = arith.addf %424, %425 : vector<2x25xf32>
    %434 = arith.addf %426, %427 : vector<2x25xf32>
    %435 = arith.addf %428, %429 : vector<2x25xf32>
    %436 = arith.addf %430, %431 : vector<2x25xf32>
    %437 = arith.addf %432, %433 : vector<2x25xf32>
    %438 = arith.addf %434, %435 : vector<2x25xf32>
    %439 = arith.addf %436, %437 : vector<2x25xf32>
    %440 = arith.addf %439, %438 : vector<2x25xf32>
    %cst_223 = arith.constant 0.000000e+00 : f32
    %441 = vector.broadcast %cst_223 : f32 to vector<2x25xf32>
    %442 = arith.maximumf %440, %441 : vector<2x25xf32>
    %c2_224 = arith.constant 2 : index
    %c0_225 = arith.constant 0 : index
    %c0_226 = arith.constant 0 : index
    %443 = vector.load %arg3[%c2_224, %c0_225, %c0_226] : memref<4x1x25xf32, #tpu.memory_space<vmem>>, vector<1x1x25xf32>
    %444 = vector.shape_cast %443 : vector<1x1x25xf32> to vector<1x25xf32>
    %445 = vector.broadcast %444 : vector<1x25xf32> to vector<2x25xf32>
    %446 = arith.mulf %442, %445 : vector<2x25xf32>
    %c72 = arith.constant 72 : index
    %447 = memref.load %arg0[%c72] : memref<96xf32, #tpu.memory_space<smem>>
    %c0_227 = arith.constant 0 : index
    %c0_228 = arith.constant 0 : index
    %c0_229 = arith.constant 0 : index
    %448 = vector.load %arg2[%c0_227, %c0_228, %c0_229] : memref<24x2x25xf32, #tpu.memory_space<vmem>>, vector<1x2x25xf32>
    %449 = vector.shape_cast %448 : vector<1x2x25xf32> to vector<2x25xf32>
    %450 = vector.broadcast %447 : f32 to vector<2x25xf32>
    %451 = arith.mulf %450, %449 : vector<2x25xf32>
    %c73 = arith.constant 73 : index
    %452 = memref.load %arg0[%c73] : memref<96xf32, #tpu.memory_space<smem>>
    %c1_230 = arith.constant 1 : index
    %c0_231 = arith.constant 0 : index
    %c0_232 = arith.constant 0 : index
    %453 = vector.load %arg2[%c1_230, %c0_231, %c0_232] : memref<24x2x25xf32, #tpu.memory_space<vmem>>, vector<1x2x25xf32>
    %454 = vector.shape_cast %453 : vector<1x2x25xf32> to vector<2x25xf32>
    %455 = vector.broadcast %452 : f32 to vector<2x25xf32>
    %456 = arith.mulf %455, %454 : vector<2x25xf32>
    %c74 = arith.constant 74 : index
    %457 = memref.load %arg0[%c74] : memref<96xf32, #tpu.memory_space<smem>>
    %c2_233 = arith.constant 2 : index
    %c0_234 = arith.constant 0 : index
    %c0_235 = arith.constant 0 : index
    %458 = vector.load %arg2[%c2_233, %c0_234, %c0_235] : memref<24x2x25xf32, #tpu.memory_space<vmem>>, vector<1x2x25xf32>
    %459 = vector.shape_cast %458 : vector<1x2x25xf32> to vector<2x25xf32>
    %460 = vector.broadcast %457 : f32 to vector<2x25xf32>
    %461 = arith.mulf %460, %459 : vector<2x25xf32>
    %c75 = arith.constant 75 : index
    %462 = memref.load %arg0[%c75] : memref<96xf32, #tpu.memory_space<smem>>
    %c3_236 = arith.constant 3 : index
    %c0_237 = arith.constant 0 : index
    %c0_238 = arith.constant 0 : index
    %463 = vector.load %arg2[%c3_236, %c0_237, %c0_238] : memref<24x2x25xf32, #tpu.memory_space<vmem>>, vector<1x2x25xf32>
    %464 = vector.shape_cast %463 : vector<1x2x25xf32> to vector<2x25xf32>
    %465 = vector.broadcast %462 : f32 to vector<2x25xf32>
    %466 = arith.mulf %465, %464 : vector<2x25xf32>
    %c76 = arith.constant 76 : index
    %467 = memref.load %arg0[%c76] : memref<96xf32, #tpu.memory_space<smem>>
    %c4_239 = arith.constant 4 : index
    %c0_240 = arith.constant 0 : index
    %c0_241 = arith.constant 0 : index
    %468 = vector.load %arg2[%c4_239, %c0_240, %c0_241] : memref<24x2x25xf32, #tpu.memory_space<vmem>>, vector<1x2x25xf32>
    %469 = vector.shape_cast %468 : vector<1x2x25xf32> to vector<2x25xf32>
    %470 = vector.broadcast %467 : f32 to vector<2x25xf32>
    %471 = arith.mulf %470, %469 : vector<2x25xf32>
    %c77 = arith.constant 77 : index
    %472 = memref.load %arg0[%c77] : memref<96xf32, #tpu.memory_space<smem>>
    %c5_242 = arith.constant 5 : index
    %c0_243 = arith.constant 0 : index
    %c0_244 = arith.constant 0 : index
    %473 = vector.load %arg2[%c5_242, %c0_243, %c0_244] : memref<24x2x25xf32, #tpu.memory_space<vmem>>, vector<1x2x25xf32>
    %474 = vector.shape_cast %473 : vector<1x2x25xf32> to vector<2x25xf32>
    %475 = vector.broadcast %472 : f32 to vector<2x25xf32>
    %476 = arith.mulf %475, %474 : vector<2x25xf32>
    %c78 = arith.constant 78 : index
    %477 = memref.load %arg0[%c78] : memref<96xf32, #tpu.memory_space<smem>>
    %c6_245 = arith.constant 6 : index
    %c0_246 = arith.constant 0 : index
    %c0_247 = arith.constant 0 : index
    %478 = vector.load %arg2[%c6_245, %c0_246, %c0_247] : memref<24x2x25xf32, #tpu.memory_space<vmem>>, vector<1x2x25xf32>
    %479 = vector.shape_cast %478 : vector<1x2x25xf32> to vector<2x25xf32>
    %480 = vector.broadcast %477 : f32 to vector<2x25xf32>
    %481 = arith.mulf %480, %479 : vector<2x25xf32>
    %c79 = arith.constant 79 : index
    %482 = memref.load %arg0[%c79] : memref<96xf32, #tpu.memory_space<smem>>
    %c7_248 = arith.constant 7 : index
    %c0_249 = arith.constant 0 : index
    %c0_250 = arith.constant 0 : index
    %483 = vector.load %arg2[%c7_248, %c0_249, %c0_250] : memref<24x2x25xf32, #tpu.memory_space<vmem>>, vector<1x2x25xf32>
    %484 = vector.shape_cast %483 : vector<1x2x25xf32> to vector<2x25xf32>
    %485 = vector.broadcast %482 : f32 to vector<2x25xf32>
    %486 = arith.mulf %485, %484 : vector<2x25xf32>
    %c80 = arith.constant 80 : index
    %487 = memref.load %arg0[%c80] : memref<96xf32, #tpu.memory_space<smem>>
    %c8_251 = arith.constant 8 : index
    %c0_252 = arith.constant 0 : index
    %c0_253 = arith.constant 0 : index
    %488 = vector.load %arg2[%c8_251, %c0_252, %c0_253] : memref<24x2x25xf32, #tpu.memory_space<vmem>>, vector<1x2x25xf32>
    %489 = vector.shape_cast %488 : vector<1x2x25xf32> to vector<2x25xf32>
    %490 = vector.broadcast %487 : f32 to vector<2x25xf32>
    %491 = arith.mulf %490, %489 : vector<2x25xf32>
    %c81 = arith.constant 81 : index
    %492 = memref.load %arg0[%c81] : memref<96xf32, #tpu.memory_space<smem>>
    %c9_254 = arith.constant 9 : index
    %c0_255 = arith.constant 0 : index
    %c0_256 = arith.constant 0 : index
    %493 = vector.load %arg2[%c9_254, %c0_255, %c0_256] : memref<24x2x25xf32, #tpu.memory_space<vmem>>, vector<1x2x25xf32>
    %494 = vector.shape_cast %493 : vector<1x2x25xf32> to vector<2x25xf32>
    %495 = vector.broadcast %492 : f32 to vector<2x25xf32>
    %496 = arith.mulf %495, %494 : vector<2x25xf32>
    %c82 = arith.constant 82 : index
    %497 = memref.load %arg0[%c82] : memref<96xf32, #tpu.memory_space<smem>>
    %c10_257 = arith.constant 10 : index
    %c0_258 = arith.constant 0 : index
    %c0_259 = arith.constant 0 : index
    %498 = vector.load %arg2[%c10_257, %c0_258, %c0_259] : memref<24x2x25xf32, #tpu.memory_space<vmem>>, vector<1x2x25xf32>
    %499 = vector.shape_cast %498 : vector<1x2x25xf32> to vector<2x25xf32>
    %500 = vector.broadcast %497 : f32 to vector<2x25xf32>
    %501 = arith.mulf %500, %499 : vector<2x25xf32>
    %c83 = arith.constant 83 : index
    %502 = memref.load %arg0[%c83] : memref<96xf32, #tpu.memory_space<smem>>
    %c11_260 = arith.constant 11 : index
    %c0_261 = arith.constant 0 : index
    %c0_262 = arith.constant 0 : index
    %503 = vector.load %arg2[%c11_260, %c0_261, %c0_262] : memref<24x2x25xf32, #tpu.memory_space<vmem>>, vector<1x2x25xf32>
    %504 = vector.shape_cast %503 : vector<1x2x25xf32> to vector<2x25xf32>
    %505 = vector.broadcast %502 : f32 to vector<2x25xf32>
    %506 = arith.mulf %505, %504 : vector<2x25xf32>
    %c84 = arith.constant 84 : index
    %507 = memref.load %arg0[%c84] : memref<96xf32, #tpu.memory_space<smem>>
    %c12_263 = arith.constant 12 : index
    %c0_264 = arith.constant 0 : index
    %c0_265 = arith.constant 0 : index
    %508 = vector.load %arg2[%c12_263, %c0_264, %c0_265] : memref<24x2x25xf32, #tpu.memory_space<vmem>>, vector<1x2x25xf32>
    %509 = vector.shape_cast %508 : vector<1x2x25xf32> to vector<2x25xf32>
    %510 = vector.broadcast %507 : f32 to vector<2x25xf32>
    %511 = arith.mulf %510, %509 : vector<2x25xf32>
    %c85 = arith.constant 85 : index
    %512 = memref.load %arg0[%c85] : memref<96xf32, #tpu.memory_space<smem>>
    %c13_266 = arith.constant 13 : index
    %c0_267 = arith.constant 0 : index
    %c0_268 = arith.constant 0 : index
    %513 = vector.load %arg2[%c13_266, %c0_267, %c0_268] : memref<24x2x25xf32, #tpu.memory_space<vmem>>, vector<1x2x25xf32>
    %514 = vector.shape_cast %513 : vector<1x2x25xf32> to vector<2x25xf32>
    %515 = vector.broadcast %512 : f32 to vector<2x25xf32>
    %516 = arith.mulf %515, %514 : vector<2x25xf32>
    %c86 = arith.constant 86 : index
    %517 = memref.load %arg0[%c86] : memref<96xf32, #tpu.memory_space<smem>>
    %c14_269 = arith.constant 14 : index
    %c0_270 = arith.constant 0 : index
    %c0_271 = arith.constant 0 : index
    %518 = vector.load %arg2[%c14_269, %c0_270, %c0_271] : memref<24x2x25xf32, #tpu.memory_space<vmem>>, vector<1x2x25xf32>
    %519 = vector.shape_cast %518 : vector<1x2x25xf32> to vector<2x25xf32>
    %520 = vector.broadcast %517 : f32 to vector<2x25xf32>
    %521 = arith.mulf %520, %519 : vector<2x25xf32>
    %c87 = arith.constant 87 : index
    %522 = memref.load %arg0[%c87] : memref<96xf32, #tpu.memory_space<smem>>
    %c15_272 = arith.constant 15 : index
    %c0_273 = arith.constant 0 : index
    %c0_274 = arith.constant 0 : index
    %523 = vector.load %arg2[%c15_272, %c0_273, %c0_274] : memref<24x2x25xf32, #tpu.memory_space<vmem>>, vector<1x2x25xf32>
    %524 = vector.shape_cast %523 : vector<1x2x25xf32> to vector<2x25xf32>
    %525 = vector.broadcast %522 : f32 to vector<2x25xf32>
    %526 = arith.mulf %525, %524 : vector<2x25xf32>
    %c88 = arith.constant 88 : index
    %527 = memref.load %arg0[%c88] : memref<96xf32, #tpu.memory_space<smem>>
    %c16_275 = arith.constant 16 : index
    %c0_276 = arith.constant 0 : index
    %c0_277 = arith.constant 0 : index
    %528 = vector.load %arg2[%c16_275, %c0_276, %c0_277] : memref<24x2x25xf32, #tpu.memory_space<vmem>>, vector<1x2x25xf32>
    %529 = vector.shape_cast %528 : vector<1x2x25xf32> to vector<2x25xf32>
    %530 = vector.broadcast %527 : f32 to vector<2x25xf32>
    %531 = arith.mulf %530, %529 : vector<2x25xf32>
    %c89 = arith.constant 89 : index
    %532 = memref.load %arg0[%c89] : memref<96xf32, #tpu.memory_space<smem>>
    %c17_278 = arith.constant 17 : index
    %c0_279 = arith.constant 0 : index
    %c0_280 = arith.constant 0 : index
    %533 = vector.load %arg2[%c17_278, %c0_279, %c0_280] : memref<24x2x25xf32, #tpu.memory_space<vmem>>, vector<1x2x25xf32>
    %534 = vector.shape_cast %533 : vector<1x2x25xf32> to vector<2x25xf32>
    %535 = vector.broadcast %532 : f32 to vector<2x25xf32>
    %536 = arith.mulf %535, %534 : vector<2x25xf32>
    %c90 = arith.constant 90 : index
    %537 = memref.load %arg0[%c90] : memref<96xf32, #tpu.memory_space<smem>>
    %c18_281 = arith.constant 18 : index
    %c0_282 = arith.constant 0 : index
    %c0_283 = arith.constant 0 : index
    %538 = vector.load %arg2[%c18_281, %c0_282, %c0_283] : memref<24x2x25xf32, #tpu.memory_space<vmem>>, vector<1x2x25xf32>
    %539 = vector.shape_cast %538 : vector<1x2x25xf32> to vector<2x25xf32>
    %540 = vector.broadcast %537 : f32 to vector<2x25xf32>
    %541 = arith.mulf %540, %539 : vector<2x25xf32>
    %c91 = arith.constant 91 : index
    %542 = memref.load %arg0[%c91] : memref<96xf32, #tpu.memory_space<smem>>
    %c19_284 = arith.constant 19 : index
    %c0_285 = arith.constant 0 : index
    %c0_286 = arith.constant 0 : index
    %543 = vector.load %arg2[%c19_284, %c0_285, %c0_286] : memref<24x2x25xf32, #tpu.memory_space<vmem>>, vector<1x2x25xf32>
    %544 = vector.shape_cast %543 : vector<1x2x25xf32> to vector<2x25xf32>
    %545 = vector.broadcast %542 : f32 to vector<2x25xf32>
    %546 = arith.mulf %545, %544 : vector<2x25xf32>
    %c92 = arith.constant 92 : index
    %547 = memref.load %arg0[%c92] : memref<96xf32, #tpu.memory_space<smem>>
    %c20_287 = arith.constant 20 : index
    %c0_288 = arith.constant 0 : index
    %c0_289 = arith.constant 0 : index
    %548 = vector.load %arg2[%c20_287, %c0_288, %c0_289] : memref<24x2x25xf32, #tpu.memory_space<vmem>>, vector<1x2x25xf32>
    %549 = vector.shape_cast %548 : vector<1x2x25xf32> to vector<2x25xf32>
    %550 = vector.broadcast %547 : f32 to vector<2x25xf32>
    %551 = arith.mulf %550, %549 : vector<2x25xf32>
    %c93 = arith.constant 93 : index
    %552 = memref.load %arg0[%c93] : memref<96xf32, #tpu.memory_space<smem>>
    %c21_290 = arith.constant 21 : index
    %c0_291 = arith.constant 0 : index
    %c0_292 = arith.constant 0 : index
    %553 = vector.load %arg2[%c21_290, %c0_291, %c0_292] : memref<24x2x25xf32, #tpu.memory_space<vmem>>, vector<1x2x25xf32>
    %554 = vector.shape_cast %553 : vector<1x2x25xf32> to vector<2x25xf32>
    %555 = vector.broadcast %552 : f32 to vector<2x25xf32>
    %556 = arith.mulf %555, %554 : vector<2x25xf32>
    %c94 = arith.constant 94 : index
    %557 = memref.load %arg0[%c94] : memref<96xf32, #tpu.memory_space<smem>>
    %c22_293 = arith.constant 22 : index
    %c0_294 = arith.constant 0 : index
    %c0_295 = arith.constant 0 : index
    %558 = vector.load %arg2[%c22_293, %c0_294, %c0_295] : memref<24x2x25xf32, #tpu.memory_space<vmem>>, vector<1x2x25xf32>
    %559 = vector.shape_cast %558 : vector<1x2x25xf32> to vector<2x25xf32>
    %560 = vector.broadcast %557 : f32 to vector<2x25xf32>
    %561 = arith.mulf %560, %559 : vector<2x25xf32>
    %c95 = arith.constant 95 : index
    %562 = memref.load %arg0[%c95] : memref<96xf32, #tpu.memory_space<smem>>
    %c23_296 = arith.constant 23 : index
    %c0_297 = arith.constant 0 : index
    %c0_298 = arith.constant 0 : index
    %563 = vector.load %arg2[%c23_296, %c0_297, %c0_298] : memref<24x2x25xf32, #tpu.memory_space<vmem>>, vector<1x2x25xf32>
    %564 = vector.shape_cast %563 : vector<1x2x25xf32> to vector<2x25xf32>
    %565 = vector.broadcast %562 : f32 to vector<2x25xf32>
    %566 = arith.mulf %565, %564 : vector<2x25xf32>
    %567 = arith.addf %451, %456 : vector<2x25xf32>
    %568 = arith.addf %461, %466 : vector<2x25xf32>
    %569 = arith.addf %471, %476 : vector<2x25xf32>
    %570 = arith.addf %481, %486 : vector<2x25xf32>
    %571 = arith.addf %491, %496 : vector<2x25xf32>
    %572 = arith.addf %501, %506 : vector<2x25xf32>
    %573 = arith.addf %511, %516 : vector<2x25xf32>
    %574 = arith.addf %521, %526 : vector<2x25xf32>
    %575 = arith.addf %531, %536 : vector<2x25xf32>
    %576 = arith.addf %541, %546 : vector<2x25xf32>
    %577 = arith.addf %551, %556 : vector<2x25xf32>
    %578 = arith.addf %561, %566 : vector<2x25xf32>
    %579 = arith.addf %567, %568 : vector<2x25xf32>
    %580 = arith.addf %569, %570 : vector<2x25xf32>
    %581 = arith.addf %571, %572 : vector<2x25xf32>
    %582 = arith.addf %573, %574 : vector<2x25xf32>
    %583 = arith.addf %575, %576 : vector<2x25xf32>
    %584 = arith.addf %577, %578 : vector<2x25xf32>
    %585 = arith.addf %579, %580 : vector<2x25xf32>
    %586 = arith.addf %581, %582 : vector<2x25xf32>
    %587 = arith.addf %583, %584 : vector<2x25xf32>
    %588 = arith.addf %585, %586 : vector<2x25xf32>
    %589 = arith.addf %588, %587 : vector<2x25xf32>
    %cst_299 = arith.constant 0.000000e+00 : f32
    %590 = vector.broadcast %cst_299 : f32 to vector<2x25xf32>
    %591 = arith.maximumf %589, %590 : vector<2x25xf32>
    %c3_300 = arith.constant 3 : index
    %c0_301 = arith.constant 0 : index
    %c0_302 = arith.constant 0 : index
    %592 = vector.load %arg3[%c3_300, %c0_301, %c0_302] : memref<4x1x25xf32, #tpu.memory_space<vmem>>, vector<1x1x25xf32>
    %593 = vector.shape_cast %592 : vector<1x1x25xf32> to vector<1x25xf32>
    %594 = vector.broadcast %593 : vector<1x25xf32> to vector<2x25xf32>
    %595 = arith.mulf %591, %594 : vector<2x25xf32>
    %596 = arith.addf %148, %297 : vector<2x25xf32>
    %597 = arith.addf %446, %595 : vector<2x25xf32>
    %598 = arith.addf %596, %597 : vector<2x25xf32>
    %cst_303 = arith.constant dense<0.000000e+00> : vector<2xf32>
    %599 = vector.multi_reduction <add>, %598, %cst_303 [1] : vector<2x25xf32> to vector<2xf32>
    %600 = vector.shape_cast %599 : vector<2xf32> to vector<2x1xf32>
    %c0_304 = arith.constant 0 : index
    %601 = memref.load %arg1[%c0_304] : memref<1xf32, #tpu.memory_space<smem>>
    %602 = vector.broadcast %601 : f32 to vector<2x1xf32>
    %603 = arith.addf %600, %602 : vector<2x1xf32>
    %c0_305 = arith.constant 0 : index
    %c0_306 = arith.constant 0 : index
    %604 = vector.load %arg4[%c0_305, %c0_306] : memref<2x1xf32, #tpu.memory_space<vmem>>, vector<2x1xf32>
    tpu.vector_store %arg4[%c0_305, %c0_306], %603 {strides = array<i32>} : memref<2x1xf32, #tpu.memory_space<vmem>>, vector<2x1xf32>,
    return
  }
}

</mosaic_0001>

<llo_original>
// kernel: net_forward.1
$region0: #{net_forward.1}
  #allocation0 [shape = 'u32[]', space=smem, size = 0x4, offset = 0x4, fixed_abs, tag = 'smem constant byte address 0x4 - core index']
  #allocation1 [shape = 'u32[144,128]{1,0:T(1,128)}', space=vmem, size = 0x12000, scoped, tag = 'internal scratch']
  #allocation2 [shape = 'f32[1]{0:T(128)S(6)}', space=smem, size = 0x200, scoped, tag = 'scoped memory for net_forward.1']
  %s0 = inlined_call_operand.vmem [shape: f32[96], index: 0, kind: input, shape index: {}]
  %s1 = inlined_call_operand.<no memory space> [shape: f32[1], index: 1, kind: input, shape index: {}]
  %s2 = inlined_call_operand.vmem [shape: f32[24,2,25], index: 2, kind: input, shape index: {}]
  %s3 = inlined_call_operand.vmem [shape: f32[4,1,25], index: 3, kind: input, shape index: {}]
  %s4 = inlined_call_operand.vmem [shape: f32[2,1], index: 4, kind: output, shape index: {}]
  %s5 = sld [smem:[#allocation0]]
  $region30: #{net_forward.1} parent=0
    _
  %s7 = ssub.s32 1, %s5
  %s8 = scalar_select 0, %s7, %s5
  %9 = sst [smem:[#allocation2]] %s1
  $region1: #{net_forward.1} parent=0
    #allocation3 [shape = 'u8[512]{0}', space=smem, size = 0x200, scoped, tag = 'input window, operand 0, single buffered']
    #allocation4 [shape = 's32[1]{0}', space=sflag, size = 0x4, scoped, tag = 'scoped memory for net_forward.1']
    %10 = vsyncpa [#allocation4], 0
    // Predicated region
    $region2: #{net_forward.1} parent=1 // pred_check
      _
    $region3: #{net_forward.1} parent=1 // pred_check_branch
      %12 = sbr.rel (0) target = $region5
    $region4: #{net_forward.1} parent=1 // pred_region
      %s14 = ssub.s32 16, 16
      %15 = vsyncadd [#allocation4], %s14
      %s17 = sshll.u32 %s0, 4
      %s18 = int_to_ptr.vmem [resolvable:$true] %s17
      %20 = dma.vmem_to_smem %s18, 16, [#allocation3], [#allocation4]
    $region5: #{net_forward.1} parent=1 // pred_fallthru
      _
    // Predicated region
    $region6: #{net_forward.1} parent=1 // pred_check
      _
    $region7: #{net_forward.1} parent=1 // pred_check_branch
      %22 = sbr.rel (0) target = $region9
    $region8: #{net_forward.1} parent=1 // pred_region
      _
    $region9: #{net_forward.1} parent=1 // pred_fallthru
      _
    // Predicated region
    $region10: #{net_forward.1} parent=1 // pred_check
      _
    $region11: #{net_forward.1} parent=1 // pred_check_branch
      %24 = sbr.rel (0) target = $region13
    $region12: #{net_forward.1} parent=1 // pred_region
      _
    $region13: #{net_forward.1} parent=1 // pred_fallthru
      _
    // Predicated region
    $region14: #{net_forward.1} parent=1 // pred_check
      _
    $region15: #{net_forward.1} parent=1 // pred_check_branch
      %26 = sbr.rel (0) target = $region17
    $region16: #{net_forward.1} parent=1 // pred_region
      _
    $region17: #{net_forward.1} parent=1 // pred_fallthru
      _
    // Predicated region
    $region18: #{net_forward.1} parent=1 // pred_check
      _
    $region19: #{net_forward.1} parent=1 // pred_check_branch
      %28 = sbr.rel (0) target = $region21
    $region20: #{net_forward.1} parent=1 // pred_region
      %29 = dma.done [#allocation4], 16
    $region21: #{net_forward.1} parent=1 // pred_fallthru
      _
    %30 = sfence
    %s31 = sld [smem:[#allocation3]]
    %v32 = vld [vmem:[%s2] sm:$0x3]
    %v33 = vstv %s31
    %v34 = vmul.f32 %v33, %v32
    %s35 = sld [smem:[#allocation3 + $0x1]]
    %s36 = scalar_lea.vmem %s2, 2
    %v37 = vld [vmem:[%s36] sm:$0x3]
    %v38 = vstv %s35
    %v39 = vmul.f32 %v38, %v37
    %s40 = sld [smem:[#allocation3 + $0x2]]
    %s41 = scalar_lea.vmem %s2, 4
    %v42 = vld [vmem:[%s41] sm:$0x3]
    %v43 = vstv %s40
    %v44 = vmul.f32 %v43, %v42
    %s45 = sld [smem:[#allocation3 + $0x3]]
    %s46 = scalar_lea.vmem %s2, 6
    %v47 = vld [vmem:[%s46] sm:$0x3]
    %v48 = vstv %s45
    %v49 = vmul.f32 %v48, %v47
    %s50 = sld [smem:[#allocation3 + $0x4]]
    %s51 = scalar_lea.vmem %s2, 8
    %v52 = vld [vmem:[%s51] sm:$0x3]
    %v53 = vstv %s50
    %v54 = vmul.f32 %v53, %v52
    %s55 = sld [smem:[#allocation3 + $0x5]]
    %s56 = scalar_lea.vmem %s2, 10
    %v57 = vld [vmem:[%s56] sm:$0x3]
    %v58 = vstv %s55
    %v59 = vmul.f32 %v58, %v57
    %s60 = sld [smem:[#allocation3 + $0x6]]
    %s61 = scalar_lea.vmem %s2, 12
    %v62 = vld [vmem:[%s61] sm:$0x3]
    %v63 = vstv %s60
    %v64 = vmul.f32 %v63, %v62
    %s65 = sld [smem:[#allocation3 + $0x7]]
    %s66 = scalar_lea.vmem %s2, 14
    %v67 = vld [vmem:[%s66] sm:$0x3]
    %v68 = vstv %s65
    %v69 = vmul.f32 %v68, %v67
    %s70 = sld [smem:[#allocation3 + $0x8]]
    %s71 = scalar_lea.vmem %s2, 16
    %v72 = vld [vmem:[%s71] sm:$0x3]
    %v73 = vstv %s70
    %v74 = vmul.f32 %v73, %v72
    %s75 = sld [smem:[#allocation3 + $0x9]]
    %s76 = scalar_lea.vmem %s2, 18
    %v77 = vld [vmem:[%s76] sm:$0x3]
    %v78 = vstv %s75
    %v79 = vmul.f32 %v78, %v77
    %s80 = sld [smem:[#allocation3 + $0xa]]
    %s81 = scalar_lea.vmem %s2, 20
    %v82 = vld [vmem:[%s81] sm:$0x3]
    %v83 = vstv %s80
    %v84 = vmul.f32 %v83, %v82
    %s85 = sld [smem:[#allocation3 + $0xb]]
    %s86 = scalar_lea.vmem %s2, 22
    %v87 = vld [vmem:[%s86] sm:$0x3]
    %v88 = vstv %s85
    %v89 = vmul.f32 %v88, %v87
    %s90 = sld [smem:[#allocation3 + $0xc]]
    %s91 = scalar_lea.vmem %s2, 24
    %v92 = vld [vmem:[%s91] sm:$0x3]
    %v93 = vstv %s90
    %v94 = vmul.f32 %v93, %v92
    %s95 = sld [smem:[#allocation3 + $0xd]]
    %s96 = scalar_lea.vmem %s2, 26
    %v97 = vld [vmem:[%s96] sm:$0x3]
    %v98 = vstv %s95
    %v99 = vmul.f32 %v98, %v97
    %s100 = sld [smem:[#allocation3 + $0xe]]
    %s101 = scalar_lea.vmem %s2, 28
    %v102 = vld [vmem:[%s101] sm:$0x3]
    %v103 = vstv %s100
    %v104 = vmul.f32 %v103, %v102
    %s105 = sld [smem:[#allocation3 + $0xf]]
    %s106 = scalar_lea.vmem %s2, 30
    %v107 = vld [vmem:[%s106] sm:$0x3]
    %v108 = vstv %s105
    %v109 = vmul.f32 %v108, %v107
    %s110 = sld [smem:[#allocation3 + $0x10]]
    %s111 = scalar_lea.vmem %s2, 32
    %v112 = vld [vmem:[%s111] sm:$0x3]
    %v113 = vstv %s110
    %v114 = vmul.f32 %v113, %v112
    %s115 = sld [smem:[#allocation3 + $0x11]]
    %s116 = scalar_lea.vmem %s2, 34
    %v117 = vld [vmem:[%s116] sm:$0x3]
    %v118 = vstv %s115
    %v119 = vmul.f32 %v118, %v117
    %s120 = sld [smem:[#allocation3 + $0x12]]
    %s121 = scalar_lea.vmem %s2, 36
    %v122 = vld [vmem:[%s121] sm:$0x3]
    %v123 = vstv %s120
    %v124 = vmul.f32 %v123, %v122
    %s125 = sld [smem:[#allocation3 + $0x13]]
    %s126 = scalar_lea.vmem %s2, 38
    %v127 = vld [vmem:[%s126] sm:$0x3]
    %v128 = vstv %s125
    %v129 = vmul.f32 %v128, %v127
    %s130 = sld [smem:[#allocation3 + $0x14]]
    %s131 = scalar_lea.vmem %s2, 40
    %v132 = vld [vmem:[%s131] sm:$0x3]
    %v133 = vstv %s130
    %v134 = vmul.f32 %v133, %v132
    %s135 = sld [smem:[#allocation3 + $0x15]]
    %s136 = scalar_lea.vmem %s2, 42
    %v137 = vld [vmem:[%s136] sm:$0x3]
    %v138 = vstv %s135
    %v139 = vmul.f32 %v138, %v137
    %s140 = sld [smem:[#allocation3 + $0x16]]
    %s141 = scalar_lea.vmem %s2, 44
    %v142 = vld [vmem:[%s141] sm:$0x3]
    %v143 = vstv %s140
    %v144 = vmul.f32 %v143, %v142
    %s145 = sld [smem:[#allocation3 + $0x17]]
    %s146 = scalar_lea.vmem %s2, 46
    %v147 = vld [vmem:[%s146] sm:$0x3]
    %v148 = vstv %s145
    %v149 = vmul.f32 %v148, %v147
    %v150 = vadd.f32 %v34, %v39
    %v151 = vadd.f32 %v44, %v49
    %v152 = vadd.f32 %v54, %v59
    %v153 = vadd.f32 %v64, %v69
    %v154 = vadd.f32 %v74, %v79
    %v155 = vadd.f32 %v84, %v89
    %v156 = vadd.f32 %v94, %v99
    %v157 = vadd.f32 %v104, %v109
    %v158 = vadd.f32 %v114, %v119
    %v159 = vadd.f32 %v124, %v129
    %v160 = vadd.f32 %v134, %v139
    %v161 = vadd.f32 %v144, %v149
    %v162 = vadd.f32 %v150, %v151
    %v163 = vadd.f32 %v152, %v153
    %v164 = vadd.f32 %v154, %v155
    %v165 = vadd.f32 %v156, %v157
    %v166 = vadd.f32 %v158, %v159
    %v167 = vadd.f32 %v160, %v161
    %v168 = vadd.f32 %v162, %v163
    %v169 = vadd.f32 %v164, %v165
    %v170 = vadd.f32 %v166, %v167
    %v171 = vadd.f32 %v168, %v169
    %v172 = vadd.f32 %v171, %v170
    %v173 = vmax.f32 %v172, 0.0
    %v174 = vld [vmem:[%s3] sm:$0x1]
    %v176 = vlaneseq
    %v177 = vshrl.u32 %v176, 7
    %v178 = vsub.s32 0, %v177
    %v179 = vrot.slane %v174, %v178
    %v181 = vmul.f32 %v173, %v179
    %s182 = sld [smem:[#allocation3 + $0x18]]
    %v183 = vstv %s182
    %v184 = vmul.f32 %v183, %v32
    %s185 = sld [smem:[#allocation3 + $0x19]]
    %v186 = vstv %s185
    %v187 = vmul.f32 %v186, %v37
    %s188 = sld [smem:[#allocation3 + $0x1a]]
    %v189 = vstv %s188
    %v190 = vmul.f32 %v189, %v42
    %s191 = sld [smem:[#allocation3 + $0x1b]]
    %v192 = vstv %s191
    %v193 = vmul.f32 %v192, %v47
    %s194 = sld [smem:[#allocation3 + $0x1c]]
    %v195 = vstv %s194
    %v196 = vmul.f32 %v195, %v52
    %s197 = sld [smem:[#allocation3 + $0x1d]]
    %v198 = vstv %s197
    %v199 = vmul.f32 %v198, %v57
    %s200 = sld [smem:[#allocation3 + $0x1e]]
    %v201 = vstv %s200
    %v202 = vmul.f32 %v201, %v62
    %s203 = sld [smem:[#allocation3 + $0x1f]]
    %v204 = vstv %s203
    %v205 = vmul.f32 %v204, %v67
    %s206 = sld [smem:[#allocation3 + $0x20]]
    %v207 = vstv %s206
    %v208 = vmul.f32 %v207, %v72
    %s209 = sld [smem:[#allocation3 + $0x21]]
    %v210 = vstv %s209
    %v211 = vmul.f32 %v210, %v77
    %s212 = sld [smem:[#allocation3 + $0x22]]
    %v213 = vstv %s212
    %v214 = vmul.f32 %v213, %v82
    %s215 = sld [smem:[#allocation3 + $0x23]]
    %v216 = vstv %s215
    %v217 = vmul.f32 %v216, %v87
    %s218 = sld [smem:[#allocation3 + $0x24]]
    %v219 = vstv %s218
    %v220 = vmul.f32 %v219, %v92
    %s221 = sld [smem:[#allocation3 + $0x25]]
    %v222 = vstv %s221
    %v223 = vmul.f32 %v222, %v97
    %s224 = sld [smem:[#allocation3 + $0x26]]
    %v225 = vstv %s224
    %v226 = vmul.f32 %v225, %v102
    %s227 = sld [smem:[#allocation3 + $0x27]]
    %v228 = vstv %s227
    %v229 = vmul.f32 %v228, %v107
    %s230 = sld [smem:[#allocation3 + $0x28]]
    %v231 = vstv %s230
    %v232 = vmul.f32 %v231, %v112
    %s233 = sld [smem:[#allocation3 + $0x29]]
    %v234 = vstv %s233
    %v235 = vmul.f32 %v234, %v117
    %s236 = sld [smem:[#allocation3 + $0x2a]]
    %v237 = vstv %s236
    %v238 = vmul.f32 %v237, %v122
    %s239 = sld [smem:[#allocation3 + $0x2b]]
    %v240 = vstv %s239
    %v241 = vmul.f32 %v240, %v127
    %s242 = sld [smem:[#allocation3 + $0x2c]]
    %v243 = vstv %s242
    %v244 = vmul.f32 %v243, %v132
    %s245 = sld [smem:[#allocation3 + $0x2d]]
    %v246 = vstv %s245
    %v247 = vmul.f32 %v246, %v137
    %s248 = sld [smem:[#allocation3 + $0x2e]]
    %v249 = vstv %s248
    %v250 = vmul.f32 %v249, %v142
    %s251 = sld [smem:[#allocation3 + $0x2f]]
    %v252 = vstv %s251
    %v253 = vmul.f32 %v252, %v147
    %v254 = vadd.f32 %v184, %v187
    %v255 = vadd.f32 %v190, %v193
    %v256 = vadd.f32 %v196, %v199
    %v257 = vadd.f32 %v202, %v205
    %v258 = vadd.f32 %v208, %v211
    %v259 = vadd.f32 %v214, %v217
    %v260 = vadd.f32 %v220, %v223
    %v261 = vadd.f32 %v226, %v229
    %v262 = vadd.f32 %v232, %v235
    %v263 = vadd.f32 %v238, %v241
    %v264 = vadd.f32 %v244, %v247
    %v265 = vadd.f32 %v250, %v253
    %v266 = vadd.f32 %v254, %v255
    %v267 = vadd.f32 %v256, %v257
    %v268 = vadd.f32 %v258, %v259
    %v269 = vadd.f32 %v260, %v261
    %v270 = vadd.f32 %v262, %v263
    %v271 = vadd.f32 %v264, %v265
    %v272 = vadd.f32 %v266, %v267
    %v273 = vadd.f32 %v268, %v269
    %v274 = vadd.f32 %v270, %v271
    %v275 = vadd.f32 %v272, %v273
    %v276 = vadd.f32 %v275, %v274
    %v277 = vmax.f32 %v276, 0.0
    %s278 = scalar_lea.vmem %s3, 1
    %v279 = vld [vmem:[%s278] sm:$0x1]
    %v281 = vlaneseq
    %v282 = vshrl.u32 %v281, 7
    %v283 = vsub.s32 0, %v282
    %v284 = vrot.slane %v279, %v283
    %v286 = vmul.f32 %v277, %v284
    %s287 = sld [smem:[#allocation3 + $0x30]]
    %v288 = vstv %s287
    %v289 = vmul.f32 %v288, %v32
    %s290 = sld [smem:[#allocation3 + $0x31]]
    %v291 = vstv %s290
    %v292 = vmul.f32 %v291, %v37
    %s293 = sld [smem:[#allocation3 + $0x32]]
    %v294 = vstv %s293
    %v295 = vmul.f32 %v294, %v42
    %s296 = sld [smem:[#allocation3 + $0x33]]
    %v297 = vstv %s296
    %v298 = vmul.f32 %v297, %v47
    %s299 = sld [smem:[#allocation3 + $0x34]]
    %v300 = vstv %s299
    %v301 = vmul.f32 %v300, %v52
    %s302 = sld [smem:[#allocation3 + $0x35]]
    %v303 = vstv %s302
    %v304 = vmul.f32 %v303, %v57
    %s305 = sld [smem:[#allocation3 + $0x36]]
    %v306 = vstv %s305
    %v307 = vmul.f32 %v306, %v62
    %s308 = sld [smem:[#allocation3 + $0x37]]
    %v309 = vstv %s308
    %v310 = vmul.f32 %v309, %v67
    %s311 = sld [smem:[#allocation3 + $0x38]]
    %v312 = vstv %s311
    %v313 = vmul.f32 %v312, %v72
    %s314 = sld [smem:[#allocation3 + $0x39]]
    %v315 = vstv %s314
    %v316 = vmul.f32 %v315, %v77
    %s317 = sld [smem:[#allocation3 + $0x3a]]
    %v318 = vstv %s317
    %v319 = vmul.f32 %v318, %v82
    %s320 = sld [smem:[#allocation3 + $0x3b]]
    %v321 = vstv %s320
    %v322 = vmul.f32 %v321, %v87
    %s323 = sld [smem:[#allocation3 + $0x3c]]
    %v324 = vstv %s323
    %v325 = vmul.f32 %v324, %v92
    %s326 = sld [smem:[#allocation3 + $0x3d]]
    %v327 = vstv %s326
    %v328 = vmul.f32 %v327, %v97
    %s329 = sld [smem:[#allocation3 + $0x3e]]
    %v330 = vstv %s329
    %v331 = vmul.f32 %v330, %v102
    %s332 = sld [smem:[#allocation3 + $0x3f]]
    %v333 = vstv %s332
    %v334 = vmul.f32 %v333, %v107
    %s335 = sld [smem:[#allocation3 + $0x40]]
    %v336 = vstv %s335
    %v337 = vmul.f32 %v336, %v112
    %s338 = sld [smem:[#allocation3 + $0x41]]
    %v339 = vstv %s338
    %v340 = vmul.f32 %v339, %v117
    %s341 = sld [smem:[#allocation3 + $0x42]]
    %v342 = vstv %s341
    %v343 = vmul.f32 %v342, %v122
    %s344 = sld [smem:[#allocation3 + $0x43]]
    %v345 = vstv %s344
    %v346 = vmul.f32 %v345, %v127
    %s347 = sld [smem:[#allocation3 + $0x44]]
    %v348 = vstv %s347
    %v349 = vmul.f32 %v348, %v132
    %s350 = sld [smem:[#allocation3 + $0x45]]
    %v351 = vstv %s350
    %v352 = vmul.f32 %v351, %v137
    %s353 = sld [smem:[#allocation3 + $0x46]]
    %v354 = vstv %s353
    %v355 = vmul.f32 %v354, %v142
    %s356 = sld [smem:[#allocation3 + $0x47]]
    %v357 = vstv %s356
    %v358 = vmul.f32 %v357, %v147
    %v359 = vadd.f32 %v289, %v292
    %v360 = vadd.f32 %v295, %v298
    %v361 = vadd.f32 %v301, %v304
    %v362 = vadd.f32 %v307, %v310
    %v363 = vadd.f32 %v313, %v316
    %v364 = vadd.f32 %v319, %v322
    %v365 = vadd.f32 %v325, %v328
    %v366 = vadd.f32 %v331, %v334
    %v367 = vadd.f32 %v337, %v340
    %v368 = vadd.f32 %v343, %v346
    %v369 = vadd.f32 %v349, %v352
    %v370 = vadd.f32 %v355, %v358
    %v371 = vadd.f32 %v359, %v360
    %v372 = vadd.f32 %v361, %v362
    %v373 = vadd.f32 %v363, %v364
    %v374 = vadd.f32 %v365, %v366
    %v375 = vadd.f32 %v367, %v368
    %v376 = vadd.f32 %v369, %v370
    %v377 = vadd.f32 %v371, %v372
    %v378 = vadd.f32 %v373, %v374
    %v379 = vadd.f32 %v375, %v376
    %v380 = vadd.f32 %v377, %v378
    %v381 = vadd.f32 %v380, %v379
    %v382 = vmax.f32 %v381, 0.0
    %s383 = scalar_lea.vmem %s3, 2
    %v384 = vld [vmem:[%s383] sm:$0x1]
    %v386 = vlaneseq
    %v387 = vshrl.u32 %v386, 7
    %v388 = vsub.s32 0, %v387
    %v389 = vrot.slane %v384, %v388
    %v391 = vmul.f32 %v382, %v389
    %s392 = sld [smem:[#allocation3 + $0x48]]
    %v393 = vstv %s392
    %v394 = vmul.f32 %v393, %v32
    %s395 = sld [smem:[#allocation3 + $0x49]]
    %v396 = vstv %s395
    %v397 = vmul.f32 %v396, %v37
    %s398 = sld [smem:[#allocation3 + $0x4a]]
    %v399 = vstv %s398
    %v400 = vmul.f32 %v399, %v42
    %s401 = sld [smem:[#allocation3 + $0x4b]]
    %v402 = vstv %s401
    %v403 = vmul.f32 %v402, %v47
    %s404 = sld [smem:[#allocation3 + $0x4c]]
    %v405 = vstv %s404
    %v406 = vmul.f32 %v405, %v52
    %s407 = sld [smem:[#allocation3 + $0x4d]]
    %v408 = vstv %s407
    %v409 = vmul.f32 %v408, %v57
    %s410 = sld [smem:[#allocation3 + $0x4e]]
    %v411 = vstv %s410
    %v412 = vmul.f32 %v411, %v62
    %s413 = sld [smem:[#allocation3 + $0x4f]]
    %v414 = vstv %s413
    %v415 = vmul.f32 %v414, %v67
    %s416 = sld [smem:[#allocation3 + $0x50]]
    %v417 = vstv %s416
    %v418 = vmul.f32 %v417, %v72
    %s419 = sld [smem:[#allocation3 + $0x51]]
    %v420 = vstv %s419
    %v421 = vmul.f32 %v420, %v77
    %s422 = sld [smem:[#allocation3 + $0x52]]
    %v423 = vstv %s422
    %v424 = vmul.f32 %v423, %v82
    %s425 = sld [smem:[#allocation3 + $0x53]]
    %v426 = vstv %s425
    %v427 = vmul.f32 %v426, %v87
    %s428 = sld [smem:[#allocation3 + $0x54]]
    %v429 = vstv %s428
    %v430 = vmul.f32 %v429, %v92
    %s431 = sld [smem:[#allocation3 + $0x55]]
    %v432 = vstv %s431
    %v433 = vmul.f32 %v432, %v97
    %s434 = sld [smem:[#allocation3 + $0x56]]
    %v435 = vstv %s434
    %v436 = vmul.f32 %v435, %v102
    %s437 = sld [smem:[#allocation3 + $0x57]]
    %v438 = vstv %s437
    %v439 = vmul.f32 %v438, %v107
    %s440 = sld [smem:[#allocation3 + $0x58]]
    %v441 = vstv %s440
    %v442 = vmul.f32 %v441, %v112
    %s443 = sld [smem:[#allocation3 + $0x59]]
    %v444 = vstv %s443
    %v445 = vmul.f32 %v444, %v117
    %s446 = sld [smem:[#allocation3 + $0x5a]]
    %v447 = vstv %s446
    %v448 = vmul.f32 %v447, %v122
    %s449 = sld [smem:[#allocation3 + $0x5b]]
    %v450 = vstv %s449
    %v451 = vmul.f32 %v450, %v127
    %s452 = sld [smem:[#allocation3 + $0x5c]]
    %v453 = vstv %s452
    %v454 = vmul.f32 %v453, %v132
    %s455 = sld [smem:[#allocation3 + $0x5d]]
    %v456 = vstv %s455
    %v457 = vmul.f32 %v456, %v137
    %s458 = sld [smem:[#allocation3 + $0x5e]]
    %v459 = vstv %s458
    %v460 = vmul.f32 %v459, %v142
    %s461 = sld [smem:[#allocation3 + $0x5f]]
    %v462 = vstv %s461
    %v463 = vmul.f32 %v462, %v147
    %v464 = vadd.f32 %v394, %v397
    %v465 = vadd.f32 %v400, %v403
    %v466 = vadd.f32 %v406, %v409
    %v467 = vadd.f32 %v412, %v415
    %v468 = vadd.f32 %v418, %v421
    %v469 = vadd.f32 %v424, %v427
    %v470 = vadd.f32 %v430, %v433
    %v471 = vadd.f32 %v436, %v439
    %v472 = vadd.f32 %v442, %v445
    %v473 = vadd.f32 %v448, %v451
    %v474 = vadd.f32 %v454, %v457
    %v475 = vadd.f32 %v460, %v463
    %v476 = vadd.f32 %v464, %v465
    %v477 = vadd.f32 %v466, %v467
    %v478 = vadd.f32 %v468, %v469
    %v479 = vadd.f32 %v470, %v471
    %v480 = vadd.f32 %v472, %v473
    %v481 = vadd.f32 %v474, %v475
    %v482 = vadd.f32 %v476, %v477
    %v483 = vadd.f32 %v478, %v479
    %v484 = vadd.f32 %v480, %v481
    %v485 = vadd.f32 %v482, %v483
    %v486 = vadd.f32 %v485, %v484
    %v487 = vmax.f32 %v486, 0.0
    %s488 = scalar_lea.vmem %s3, 3
    %v489 = vld [vmem:[%s488] sm:$0x1]
    %v491 = vlaneseq
    %v492 = vshrl.u32 %v491, 7
    %v493 = vsub.s32 0, %v492
    %v494 = vrot.slane %v489, %v493
    %v496 = vmul.f32 %v487, %v494
    %v497 = vadd.f32 %v181, %v286
    %v498 = vadd.f32 %v391, %v496
    %v499 = vadd.f32 %v497, %v498
    %vm500 = vcmask 197632
    %v501 = vsel %vm500, %v499, 0.0
    %502 = vadd.xlane.f32.xlu0 %v501
    %v503 = vpop.xlane.xlu0 %502
    %s504 = sld [smem:[#allocation2]]
    %v505 = vstv %s504
    %v506 = vadd.f32 %v503, %v505
    %vm507 = vcmask 1024
    %508 = vst.msk [vmem:[%s4] sm:$0x3] %vm507, %v506
    // Predicated region
    $region22: #{net_forward.1} parent=1 // pred_check
      _
    $region23: #{net_forward.1} parent=1 // pred_check_branch
      %510 = sbr.rel (0) target = $region25
    $region24: #{net_forward.1} parent=1 // pred_region
      _
    $region25: #{net_forward.1} parent=1 // pred_fallthru
      _
    // Predicated region
    $region26: #{net_forward.1} parent=1 // pred_check
      _
    $region27: #{net_forward.1} parent=1 // pred_check_branch
      %512 = sbr.rel (0) target = $region29
    $region28: #{net_forward.1} parent=1 // pred_region
      _
    $region29: #{net_forward.1} parent=1 // pred_fallthru
      _
    %513 = vsyncpa [#allocation4], 1

</llo_original>
